<compile_context>
chip_gen: v7x
topology: tpu7x:2x2x1
jax: 0.10.0
libtpu: 0.0.40
codegen_flags: <defaults>
</compile_context>

<pallas_src>
import numpy as np
import jax
import jax.numpy as jnp
from jax.experimental import pallas as pl
from jax.experimental.pallas import tpu as pltpu

# ---------------- model hyper-params (small, consistent with the module) ----
B = 2          # batch
L = 8          # sequence length
D_MODEL = 32
D_INNER = 64
N_HEAD = 2
D_K = 16
D_V = 16
TEMP = float(np.power(D_K, 0.5))
INV_TEMP = 1.0 / TEMP
LN_EPS = 1e-5
NEG_BIG = -1e30   # finite "−inf" for masking (avoids NaN on fully-masked rows)


# ---------------------------------------------------------------------------
# Fused kernel: QKV proj, per-(batch, head) scaled-dot-product attention with
# mask + softmax, per-head output projection (accumulated), residual + LN,
# non_pad_mask, FFN (Conv1d k=1 == Linear), residual + LN, non_pad_mask.
# Single invocation, no grid.
# ---------------------------------------------------------------------------
def _encoder_layer_kernel(x_ref, am_ref, npm_ref,
                          wq_ref, bq_ref, wk_ref, bk_ref, wv_ref, bv_ref,
                          wfc_ref, bfc_ref, ln1g_ref, ln1b_ref,
                          w1_ref, bw1_ref, w2_ref, bw2_ref,
                          ln2g_ref, ln2b_ref,
                          out_ref, attn_ref):
    x = x_ref[...]                                   # [B*L, D_MODEL]
    residual = x

    # --- fused QKV projections over the whole batch (weights are [in, out]) ---
    q_all = jnp.dot(x, wq_ref[...], preferred_element_type=jnp.float32) + bq_ref[...]
    k_all = jnp.dot(x, wk_ref[...], preferred_element_type=jnp.float32) + bk_ref[...]
    v_all = jnp.dot(x, wv_ref[...], preferred_element_type=jnp.float32) + bv_ref[...]

    # --- scaled dot-product attention, static loops over (batch, head) ---
    probs = [[None] * B for _ in range(N_HEAD)]
    ctx_proj = []                                    # per-batch [L, D_MODEL]
    for b in range(B):                               # B, N_HEAD are tiny: static unroll
        mask_b = am_ref[b]                           # [L, L], 1.0 == masked
        qb = q_all[b * L:(b + 1) * L, :]
        kb = k_all[b * L:(b + 1) * L, :]
        vb = v_all[b * L:(b + 1) * L, :]
        acc = jnp.zeros((L, D_MODEL), jnp.float32)
        for h in range(N_HEAD):
            qh = qb[:, h * D_K:(h + 1) * D_K]        # [L, D_K]
            kh = kb[:, h * D_K:(h + 1) * D_K]        # [L, D_K]
            vh = vb[:, h * D_V:(h + 1) * D_V]        # [L, D_V]

            # q @ k^T without an explicit in-kernel transpose
            s = jax.lax.dot_general(qh, kh, (((1,), (1,)), ((), ())),
                                    preferred_element_type=jnp.float32) * INV_TEMP
            s = jnp.where(mask_b > 0.5, NEG_BIG, s)
            smax = jnp.max(s, axis=-1, keepdims=True)
            e = jnp.exp(s - smax)
            # exact reciprocal keeps tight (2e-5) parity with the reference
            p = e * pl.reciprocal(jnp.sum(e, axis=-1, keepdims=True), approx=False)
            probs[h][b] = p                          # [L, L]

            ctx = jnp.dot(p, vh, preferred_element_type=jnp.float32)            # [L, D_V]
            # fold the per-head slice of W_fc (no lane-axis concat of heads)
            acc = acc + jnp.dot(ctx, wfc_ref[h], preferred_element_type=jnp.float32)
        ctx_proj.append(acc)

    # one stacked store of all attention maps (instead of per-head stores)
    attn_ref[...] = jnp.stack([jnp.stack(probs[h], axis=0) for h in range(N_HEAD)],
                              axis=0)               # [N_HEAD, B, L, L]

    # sublane-axis concat (L is a multiple of 8 -> relayout-free)
    o = jnp.concatenate(ctx_proj, axis=0) + bfc_ref[...] + residual             # [B*L, D]

    # --- LayerNorm 1 ---
    mu = jnp.mean(o, axis=-1, keepdims=True)
    var = jnp.mean((o - mu) ** 2, axis=-1, keepdims=True)
    o = (o - mu) * jax.lax.rsqrt(var + LN_EPS) * ln1g_ref[...] + ln1b_ref[...]

    npm = npm_ref[...]                               # [B*L, 1]
    o = o * npm

    # --- Positionwise FFN (Conv1d k=1 == Linear over channels) ---
    res2 = o
    h1 = jnp.dot(o, w1_ref[...], preferred_element_type=jnp.float32) + bw1_ref[...]
    h1 = jnp.maximum(h1, 0.0)
    h2 = jnp.dot(h1, w2_ref[...], preferred_element_type=jnp.float32) + bw2_ref[...]
    o2 = h2 + res2

    # --- LayerNorm 2 ---
    mu2 = jnp.mean(o2, axis=-1, keepdims=True)
    var2 = jnp.mean((o2 - mu2) ** 2, axis=-1, keepdims=True)
    o2 = (o2 - mu2) * jax.lax.rsqrt(var2 + LN_EPS) * ln2g_ref[...] + ln2b_ref[...]
    o2 = o2 * npm

    out_ref[...] = o2


@jax.jit
def encoder_layer(x, slf_attn_mask, non_pad_mask, params):
    """x: [B, L, D_MODEL] f32; slf_attn_mask: [B, L, L] f32 (1=masked);
       non_pad_mask: [B, L, 1] f32.  Returns (enc_output [B,L,D], attn [N_HEAD*B,L,L])."""
    (wq, bq, wk, bk, wv, bv, wfc, bfc, ln1g, ln1b,
     w1, bw1, w2, bw2, ln2g, ln2b) = params

    # Pre-transpose weights at trace time (outside the kernel): [in, out] layout.
    # W_fc is additionally pre-split per head: [N_HEAD, D_V, D_MODEL].
    params_t = (wq.T, bq, wk.T, bk, wv.T, bv,
                wfc.T.reshape(N_HEAD, D_V, D_MODEL), bfc, ln1g, ln1b,
                w1.T, bw1, w2.T, bw2, ln2g, ln2b)

    x2 = x.reshape(B * L, D_MODEL)
    npm2 = non_pad_mask.reshape(B * L, 1)

    n_inputs = 3 + len(params_t)
    in_specs = [pl.BlockSpec(memory_space=pltpu.MemorySpace.VMEM)
                for _ in range(n_inputs)]
    out_specs = (pl.BlockSpec(memory_space=pltpu.MemorySpace.VMEM),
                 pl.BlockSpec(memory_space=pltpu.MemorySpace.VMEM))

    out_shapes = (jax.ShapeDtypeStruct((B * L, D_MODEL), jnp.float32),
                  jax.ShapeDtypeStruct((N_HEAD, B, L, L), jnp.float32))

    enc_out, attn = pl.pallas_call(
        _encoder_layer_kernel,
        out_shape=out_shapes,
        in_specs=in_specs,
        out_specs=out_specs,
    )(x2, slf_attn_mask, npm2, *params_t)

    enc_out = enc_out.reshape(B, L, D_MODEL)
    attn = attn.reshape(N_HEAD * B, L, L)   # head-major ordering, like PyTorch
    return enc_out, attn


# ---------------------------------------------------------------------------
# Pure-JAX reference (mirrors the PyTorch forward, dropout = identity)
# ---------------------------------------------------------------------------
def reference(x, slf_attn_mask, non_pad_mask, params):
    (wq, bq, wk, bk, wv, bv, wfc, bfc, ln1g, ln1b,
     w1, bw1, w2, bw2, ln2g, ln2b) = params
    residual = x
    q = (x @ wq.T + bq).reshape(B, L, N_HEAD, D_K)
    k = (x @ wk.T + bk).reshape(B, L, N_HEAD, D_K)
    v = (x @ wv.T + bv).reshape(B, L, N_HEAD, D_V)
    q = jnp.transpose(q, (2, 0, 1, 3)).reshape(-1, L, D_K)
    k = jnp.transpose(k, (2, 0, 1, 3)).reshape(-1, L, D_K)
    v = jnp.transpose(v, (2, 0, 1, 3)).reshape(-1, L, D_V)
    mask = jnp.tile(slf_attn_mask, (N_HEAD, 1, 1))
    attn = jnp.einsum('bqd,bkd->bqk', q, k) / TEMP
    attn = jnp.where(mask > 0.5, -jnp.inf, attn)
    attn = jax.nn.softmax(attn, axis=2)
    out = jnp.einsum('bqk,bkd->bqd', attn, v)
    out = out.reshape(N_HEAD, B, L, D_V)
    out = jnp.transpose(out, (1, 2, 0, 3)).reshape(B, L, -1)
    out = out @ wfc.T + bfc
    out = out + residual
    mu = out.mean(-1, keepdims=True); var = ((out - mu) ** 2).mean(-1, keepdims=True)
    out = (out - mu) / jnp.sqrt(var + LN_EPS) * ln1g + ln1b
    out = out * non_pad_mask
    res2 = out
    h1 = jnp.maximum(out @ w1.T + bw1, 0.0)
    h2 = h1 @ w2.T + bw2
    o2 = h2 + res2
    mu2 = o2.mean(-1, keepdims=True); var2 = ((o2 - mu2) ** 2).mean(-1, keepdims=True)
    o2 = (o2 - mu2) / jnp.sqrt(var2 + LN_EPS) * ln2g + ln2b
    o2 = o2 * non_pad_mask
    return o2, attn


# ---------------------------------------------------------------------------
if __name__ == "__main__":
    key = jax.random.PRNGKey(0)
    ks = jax.random.split(key, 12)

    # parameters (deterministic, init std roughly mirroring the module's init)
    std_qk = np.sqrt(2.0 / (D_MODEL + D_K))
    std_v = np.sqrt(2.0 / (D_MODEL + D_V))
    wq = jax.random.normal(ks[0], (N_HEAD * D_K, D_MODEL), jnp.float32) * std_qk
    wk = jax.random.normal(ks[1], (N_HEAD * D_K, D_MODEL), jnp.float32) * std_qk
    wv = jax.random.normal(ks[2], (N_HEAD * D_V, D_MODEL), jnp.float32) * std_v
    bq = jax.random.normal(ks[3], (1, N_HEAD * D_K), jnp.float32) * 0.02
    bk = jax.random.normal(ks[4], (1, N_HEAD * D_K), jnp.float32) * 0.02
    bv = jax.random.normal(ks[5], (1, N_HEAD * D_V), jnp.float32) * 0.02
    wfc = jax.random.normal(ks[6], (D_MODEL, N_HEAD * D_V), jnp.float32) * np.sqrt(
        2.0 / (D_MODEL + N_HEAD * D_V))
    bfc = jax.random.normal(ks[7], (1, D_MODEL), jnp.float32) * 0.02
    ln1g = jnp.ones((1, D_MODEL), jnp.float32)
    ln1b = jnp.zeros((1, D_MODEL), jnp.float32)
    # Conv1d(d_in, d_hid, 1) weights squeezed to [out_ch, in_ch]
    w1 = jax.random.normal(ks[8], (D_INNER, D_MODEL), jnp.float32) * (1.0 / np.sqrt(D_MODEL))
    bw1 = jax.random.normal(ks[9], (1, D_INNER), jnp.float32) * 0.02
    w2 = jax.random.normal(ks[10], (D_MODEL, D_INNER), jnp.float32) * (1.0 / np.sqrt(D_INNER))
    bw2 = jax.random.normal(ks[11], (1, D_MODEL), jnp.float32) * 0.02
    ln2g = jnp.ones((1, D_MODEL), jnp.float32)
    ln2b = jnp.zeros((1, D_MODEL), jnp.float32)

    params = (wq, bq, wk, bk, wv, bv, wfc, bfc, ln1g, ln1b,
              w1, bw1, w2, bw2, ln2g, ln2b)

    # inputs
    xkey = jax.random.PRNGKey(42)
    x = jax.random.normal(xkey, (B, L, D_MODEL), jnp.float32)

    # padding masks: batch 0 has full length L, batch 1 has length 6
    lengths = jnp.array([L, 6], dtype=jnp.int32)
    pos = jnp.arange(L)
    key_pad = (pos[None, :] >= lengths[:, None]).astype(jnp.float32)       # [B, L]
    slf_attn_mask = jnp.broadcast_to(key_pad[:, None, :], (B, L, L)).astype(jnp.float32)
    non_pad_mask = (pos[None, :] < lengths[:, None]).astype(jnp.float32)[..., None]  # [B, L, 1]

    enc_out, attn = encoder_layer(x, slf_attn_mask, non_pad_mask, params)
    jax.block_until_ready((enc_out, attn))

    ref_out, ref_attn = reference(x, slf_attn_mask, non_pad_mask, params)
    np.testing.assert_allclose(np.asarray(enc_out), np.asarray(ref_out), rtol=2e-4, atol=2e-5)
    np.testing.assert_allclose(np.asarray(attn), np.asarray(ref_attn), rtol=2e-4, atol=2e-5)

    print("KERNEL_OK")
</pallas_src>

<mosaic_0001>
module attributes {stable_mosaic.version = 11 : i64} {
  func.func @_encoder_layer_kernel(%arg0: memref<16x32xf32, #tpu.memory_space<vmem>>, %arg1: memref<2x8x8xf32, #tpu.memory_space<vmem>>, %arg2: memref<16x1xf32, #tpu.memory_space<vmem>>, %arg3: memref<32x32xf32, #tpu.memory_space<vmem>>, %arg4: memref<1x32xf32, #tpu.memory_space<vmem>>, %arg5: memref<32x32xf32, #tpu.memory_space<vmem>>, %arg6: memref<1x32xf32, #tpu.memory_space<vmem>>, %arg7: memref<32x32xf32, #tpu.memory_space<vmem>>, %arg8: memref<1x32xf32, #tpu.memory_space<vmem>>, %arg9: memref<2x16x32xf32, #tpu.memory_space<vmem>>, %arg10: memref<1x32xf32, #tpu.memory_space<vmem>>, %arg11: memref<1x32xf32, #tpu.memory_space<vmem>>, %arg12: memref<1x32xf32, #tpu.memory_space<vmem>>, %arg13: memref<32x64xf32, #tpu.memory_space<vmem>>, %arg14: memref<1x64xf32, #tpu.memory_space<vmem>>, %arg15: memref<64x32xf32, #tpu.memory_space<vmem>>, %arg16: memref<1x32xf32, #tpu.memory_space<vmem>>, %arg17: memref<1x32xf32, #tpu.memory_space<vmem>>, %arg18: memref<1x32xf32, #tpu.memory_space<vmem>>, %arg19: memref<16x32xf32, #tpu.memory_space<vmem>>, %arg20: memref<2x2x8x8xf32, #tpu.memory_space<vmem>>) attributes {dimension_semantics = [], scalar_prefetch = 0 : i64, scratch_operands = 0 : i64, tpu.core_type = #tpu.core_type<tc>} {
    %c0 = arith.constant 0 : index
    %c0_0 = arith.constant 0 : index
    %0 = vector.load %arg0[%c0, %c0_0] : memref<16x32xf32, #tpu.memory_space<vmem>>, vector<16x32xf32>
    %c0_1 = arith.constant 0 : index
    %c0_2 = arith.constant 0 : index
    %1 = vector.load %arg3[%c0_1, %c0_2] : memref<32x32xf32, #tpu.memory_space<vmem>>, vector<32x32xf32>
    %cst = arith.constant dense<0.000000e+00> : vector<16x32xf32>
    %2 = tpu.matmul %0, %1, %cst {dimension_numbers = #tpu.dot_dimension_numbers<[1], [0], [0], [1], [0, 0, 1, 1], [], []>} : vector<16x32xf32>, vector<32x32xf32>, vector<16x32xf32> -> vector<16x32xf32>
    %c0_3 = arith.constant 0 : index
    %c0_4 = arith.constant 0 : index
    %3 = vector.load %arg4[%c0_3, %c0_4] : memref<1x32xf32, #tpu.memory_space<vmem>>, vector<1x32xf32>
    %4 = vector.broadcast %3 : vector<1x32xf32> to vector<16x32xf32>
    %5 = arith.addf %2, %4 : vector<16x32xf32>
    %c0_5 = arith.constant 0 : index
    %c0_6 = arith.constant 0 : index
    %6 = vector.load %arg5[%c0_5, %c0_6] : memref<32x32xf32, #tpu.memory_space<vmem>>, vector<32x32xf32>
    %cst_7 = arith.constant dense<0.000000e+00> : vector<16x32xf32>
    %7 = tpu.matmul %0, %6, %cst_7 {dimension_numbers = #tpu.dot_dimension_numbers<[1], [0], [0], [1], [0, 0, 1, 1], [], []>} : vector<16x32xf32>, vector<32x32xf32>, vector<16x32xf32> -> vector<16x32xf32>
    %c0_8 = arith.constant 0 : index
    %c0_9 = arith.constant 0 : index
    %8 = vector.load %arg6[%c0_8, %c0_9] : memref<1x32xf32, #tpu.memory_space<vmem>>, vector<1x32xf32>
    %9 = vector.broadcast %8 : vector<1x32xf32> to vector<16x32xf32>
    %10 = arith.addf %7, %9 : vector<16x32xf32>
    %c0_10 = arith.constant 0 : index
    %c0_11 = arith.constant 0 : index
    %11 = vector.load %arg7[%c0_10, %c0_11] : memref<32x32xf32, #tpu.memory_space<vmem>>, vector<32x32xf32>
    %cst_12 = arith.constant dense<0.000000e+00> : vector<16x32xf32>
    %12 = tpu.matmul %0, %11, %cst_12 {dimension_numbers = #tpu.dot_dimension_numbers<[1], [0], [0], [1], [0, 0, 1, 1], [], []>} : vector<16x32xf32>, vector<32x32xf32>, vector<16x32xf32> -> vector<16x32xf32>
    %c0_13 = arith.constant 0 : index
    %c0_14 = arith.constant 0 : index
    %13 = vector.load %arg8[%c0_13, %c0_14] : memref<1x32xf32, #tpu.memory_space<vmem>>, vector<1x32xf32>
    %14 = vector.broadcast %13 : vector<1x32xf32> to vector<16x32xf32>
    %15 = arith.addf %12, %14 : vector<16x32xf32>
    %c0_15 = arith.constant 0 : index
    %c0_16 = arith.constant 0 : index
    %c0_17 = arith.constant 0 : index
    %16 = vector.load %arg1[%c0_15, %c0_16, %c0_17] : memref<2x8x8xf32, #tpu.memory_space<vmem>>, vector<1x8x8xf32>
    %17 = vector.shape_cast %16 : vector<1x8x8xf32> to vector<8x8xf32>
    %18 = vector.extract_strided_slice %5 {offsets = [0, 0], sizes = [8, 32], strides = [1, 1]} : vector<16x32xf32> to vector<8x32xf32>
    %19 = vector.extract_strided_slice %10 {offsets = [0, 0], sizes = [8, 32], strides = [1, 1]} : vector<16x32xf32> to vector<8x32xf32>
    %20 = vector.extract_strided_slice %15 {offsets = [0, 0], sizes = [8, 32], strides = [1, 1]} : vector<16x32xf32> to vector<8x32xf32>
    %cst_18 = arith.constant 0.000000e+00 : f32
    %21 = vector.broadcast %cst_18 : f32 to vector<8x32xf32>
    %22 = vector.extract_strided_slice %18 {offsets = [0, 0], sizes = [8, 16], strides = [1, 1]} : vector<8x32xf32> to vector<8x16xf32>
    %23 = vector.extract_strided_slice %19 {offsets = [0, 0], sizes = [8, 16], strides = [1, 1]} : vector<8x32xf32> to vector<8x16xf32>
    %24 = vector.extract_strided_slice %20 {offsets = [0, 0], sizes = [8, 16], strides = [1, 1]} : vector<8x32xf32> to vector<8x16xf32>
    %cst_19 = arith.constant dense<0.000000e+00> : vector<8x8xf32>
    %25 = tpu.matmul %22, %23, %cst_19 {dimension_numbers = #tpu.dot_dimension_numbers<[1], [1], [0], [0], [0, 0, 1, 0], [], []>} : vector<8x16xf32>, vector<8x16xf32>, vector<8x8xf32> -> vector<8x8xf32>
    %cst_20 = arith.constant 2.500000e-01 : f32
    %26 = vector.broadcast %cst_20 : f32 to vector<8x8xf32>
    %27 = arith.mulf %25, %26 : vector<8x8xf32>
    %cst_21 = arith.constant 5.000000e-01 : f32
    %28 = vector.broadcast %cst_21 : f32 to vector<8x8xf32>
    %29 = arith.cmpf ogt, %17, %28 : vector<8x8xf32>
    %cst_22 = arith.constant -1.000000e+30 : f32
    %30 = vector.broadcast %cst_22 : f32 to vector<8x8xf32>
    %31 = arith.select %29, %30, %27 : vector<8x8xi1>, vector<8x8xf32>
    %cst_23 = arith.constant dense<0xFF800000> : vector<8xf32>
    %32 = vector.multi_reduction <maximumf>, %31, %cst_23 [1] : vector<8x8xf32> to vector<8xf32>
    %33 = vector.shape_cast %32 : vector<8xf32> to vector<8x1xf32>
    %34 = vector.broadcast %33 : vector<8x1xf32> to vector<8x8xf32>
    %35 = arith.subf %31, %34 : vector<8x8xf32>
    %36 = math.exp %35 : vector<8x8xf32>
    %cst_24 = arith.constant dense<0.000000e+00> : vector<8xf32>
    %37 = vector.multi_reduction <add>, %36, %cst_24 [1] : vector<8x8xf32> to vector<8xf32>
    %38 = vector.shape_cast %37 : vector<8xf32> to vector<8x1xf32>
    %39 = tpu.reciprocal %38 : vector<8x1xf32> -> vector<8x1xf32>
    %40 = vector.broadcast %39 : vector<8x1xf32> to vector<8x8xf32>
    %41 = arith.mulf %36, %40 : vector<8x8xf32>
    %cst_25 = arith.constant dense<0.000000e+00> : vector<8x16xf32>
    %42 = tpu.matmul %41, %24, %cst_25 {dimension_numbers = #tpu.dot_dimension_numbers<[1], [0], [0], [1], [0, 0, 1, 1], [], []>} : vector<8x8xf32>, vector<8x16xf32>, vector<8x16xf32> -> vector<8x16xf32>
    %c0_26 = arith.constant 0 : index
    %c0_27 = arith.constant 0 : index
    %c0_28 = arith.constant 0 : index
    %43 = vector.load %arg9[%c0_26, %c0_27, %c0_28] : memref<2x16x32xf32, #tpu.memory_space<vmem>>, vector<1x16x32xf32>
    %44 = vector.shape_cast %43 : vector<1x16x32xf32> to vector<16x32xf32>
    %cst_29 = arith.constant dense<0.000000e+00> : vector<8x32xf32>
    %45 = tpu.matmul %42, %44, %cst_29 {dimension_numbers = #tpu.dot_dimension_numbers<[1], [0], [0], [1], [0, 0, 1, 1], [], []>} : vector<8x16xf32>, vector<16x32xf32>, vector<8x32xf32> -> vector<8x32xf32>
    %46 = arith.addf %21, %45 : vector<8x32xf32>
    %47 = vector.extract_strided_slice %18 {offsets = [0, 16], sizes = [8, 16], strides = [1, 1]} : vector<8x32xf32> to vector<8x16xf32>
    %48 = vector.extract_strided_slice %19 {offsets = [0, 16], sizes = [8, 16], strides = [1, 1]} : vector<8x32xf32> to vector<8x16xf32>
    %49 = vector.extract_strided_slice %20 {offsets = [0, 16], sizes = [8, 16], strides = [1, 1]} : vector<8x32xf32> to vector<8x16xf32>
    %cst_30 = arith.constant dense<0.000000e+00> : vector<8x8xf32>
    %50 = tpu.matmul %47, %48, %cst_30 {dimension_numbers = #tpu.dot_dimension_numbers<[1], [1], [0], [0], [0, 0, 1, 0], [], []>} : vector<8x16xf32>, vector<8x16xf32>, vector<8x8xf32> -> vector<8x8xf32>
    %cst_31 = arith.constant 2.500000e-01 : f32
    %51 = vector.broadcast %cst_31 : f32 to vector<8x8xf32>
    %52 = arith.mulf %50, %51 : vector<8x8xf32>
    %cst_32 = arith.constant 5.000000e-01 : f32
    %53 = vector.broadcast %cst_32 : f32 to vector<8x8xf32>
    %54 = arith.cmpf ogt, %17, %53 : vector<8x8xf32>
    %cst_33 = arith.constant -1.000000e+30 : f32
    %55 = vector.broadcast %cst_33 : f32 to vector<8x8xf32>
    %56 = arith.select %54, %55, %52 : vector<8x8xi1>, vector<8x8xf32>
    %cst_34 = arith.constant dense<0xFF800000> : vector<8xf32>
    %57 = vector.multi_reduction <maximumf>, %56, %cst_34 [1] : vector<8x8xf32> to vector<8xf32>
    %58 = vector.shape_cast %57 : vector<8xf32> to vector<8x1xf32>
    %59 = vector.broadcast %58 : vector<8x1xf32> to vector<8x8xf32>
    %60 = arith.subf %56, %59 : vector<8x8xf32>
    %61 = math.exp %60 : vector<8x8xf32>
    %cst_35 = arith.constant dense<0.000000e+00> : vector<8xf32>
    %62 = vector.multi_reduction <add>, %61, %cst_35 [1] : vector<8x8xf32> to vector<8xf32>
    %63 = vector.shape_cast %62 : vector<8xf32> to vector<8x1xf32>
    %64 = tpu.reciprocal %63 : vector<8x1xf32> -> vector<8x1xf32>
    %65 = vector.broadcast %64 : vector<8x1xf32> to vector<8x8xf32>
    %66 = arith.mulf %61, %65 : vector<8x8xf32>
    %cst_36 = arith.constant dense<0.000000e+00> : vector<8x16xf32>
    %67 = tpu.matmul %66, %49, %cst_36 {dimension_numbers = #tpu.dot_dimension_numbers<[1], [0], [0], [1], [0, 0, 1, 1], [], []>} : vector<8x8xf32>, vector<8x16xf32>, vector<8x16xf32> -> vector<8x16xf32>
    %c1 = arith.constant 1 : index
    %c0_37 = arith.constant 0 : index
    %c0_38 = arith.constant 0 : index
    %68 = vector.load %arg9[%c1, %c0_37, %c0_38] : memref<2x16x32xf32, #tpu.memory_space<vmem>>, vector<1x16x32xf32>
    %69 = vector.shape_cast %68 : vector<1x16x32xf32> to vector<16x32xf32>
    %cst_39 = arith.constant dense<0.000000e+00> : vector<8x32xf32>
    %70 = tpu.matmul %67, %69, %cst_39 {dimension_numbers = #tpu.dot_dimension_numbers<[1], [0], [0], [1], [0, 0, 1, 1], [], []>} : vector<8x16xf32>, vector<16x32xf32>, vector<8x32xf32> -> vector<8x32xf32>
    %71 = arith.addf %46, %70 : vector<8x32xf32>
    %c1_40 = arith.constant 1 : index
    %c0_41 = arith.constant 0 : index
    %c0_42 = arith.constant 0 : index
    %72 = vector.load %arg1[%c1_40, %c0_41, %c0_42] : memref<2x8x8xf32, #tpu.memory_space<vmem>>, vector<1x8x8xf32>
    %73 = vector.shape_cast %72 : vector<1x8x8xf32> to vector<8x8xf32>
    %74 = vector.extract_strided_slice %5 {offsets = [8, 0], sizes = [8, 32], strides = [1, 1]} : vector<16x32xf32> to vector<8x32xf32>
    %75 = vector.extract_strided_slice %10 {offsets = [8, 0], sizes = [8, 32], strides = [1, 1]} : vector<16x32xf32> to vector<8x32xf32>
    %76 = vector.extract_strided_slice %15 {offsets = [8, 0], sizes = [8, 32], strides = [1, 1]} : vector<16x32xf32> to vector<8x32xf32>
    %cst_43 = arith.constant 0.000000e+00 : f32
    %77 = vector.broadcast %cst_43 : f32 to vector<8x32xf32>
    %78 = vector.extract_strided_slice %74 {offsets = [0, 0], sizes = [8, 16], strides = [1, 1]} : vector<8x32xf32> to vector<8x16xf32>
    %79 = vector.extract_strided_slice %75 {offsets = [0, 0], sizes = [8, 16], strides = [1, 1]} : vector<8x32xf32> to vector<8x16xf32>
    %80 = vector.extract_strided_slice %76 {offsets = [0, 0], sizes = [8, 16], strides = [1, 1]} : vector<8x32xf32> to vector<8x16xf32>
    %cst_44 = arith.constant dense<0.000000e+00> : vector<8x8xf32>
    %81 = tpu.matmul %78, %79, %cst_44 {dimension_numbers = #tpu.dot_dimension_numbers<[1], [1], [0], [0], [0, 0, 1, 0], [], []>} : vector<8x16xf32>, vector<8x16xf32>, vector<8x8xf32> -> vector<8x8xf32>
    %cst_45 = arith.constant 2.500000e-01 : f32
    %82 = vector.broadcast %cst_45 : f32 to vector<8x8xf32>
    %83 = arith.mulf %81, %82 : vector<8x8xf32>
    %cst_46 = arith.constant 5.000000e-01 : f32
    %84 = vector.broadcast %cst_46 : f32 to vector<8x8xf32>
    %85 = arith.cmpf ogt, %73, %84 : vector<8x8xf32>
    %cst_47 = arith.constant -1.000000e+30 : f32
    %86 = vector.broadcast %cst_47 : f32 to vector<8x8xf32>
    %87 = arith.select %85, %86, %83 : vector<8x8xi1>, vector<8x8xf32>
    %cst_48 = arith.constant dense<0xFF800000> : vector<8xf32>
    %88 = vector.multi_reduction <maximumf>, %87, %cst_48 [1] : vector<8x8xf32> to vector<8xf32>
    %89 = vector.shape_cast %88 : vector<8xf32> to vector<8x1xf32>
    %90 = vector.broadcast %89 : vector<8x1xf32> to vector<8x8xf32>
    %91 = arith.subf %87, %90 : vector<8x8xf32>
    %92 = math.exp %91 : vector<8x8xf32>
    %cst_49 = arith.constant dense<0.000000e+00> : vector<8xf32>
    %93 = vector.multi_reduction <add>, %92, %cst_49 [1] : vector<8x8xf32> to vector<8xf32>
    %94 = vector.shape_cast %93 : vector<8xf32> to vector<8x1xf32>
    %95 = tpu.reciprocal %94 : vector<8x1xf32> -> vector<8x1xf32>
    %96 = vector.broadcast %95 : vector<8x1xf32> to vector<8x8xf32>
    %97 = arith.mulf %92, %96 : vector<8x8xf32>
    %cst_50 = arith.constant dense<0.000000e+00> : vector<8x16xf32>
    %98 = tpu.matmul %97, %80, %cst_50 {dimension_numbers = #tpu.dot_dimension_numbers<[1], [0], [0], [1], [0, 0, 1, 1], [], []>} : vector<8x8xf32>, vector<8x16xf32>, vector<8x16xf32> -> vector<8x16xf32>
    %c0_51 = arith.constant 0 : index
    %c0_52 = arith.constant 0 : index
    %c0_53 = arith.constant 0 : index
    %99 = vector.load %arg9[%c0_51, %c0_52, %c0_53] : memref<2x16x32xf32, #tpu.memory_space<vmem>>, vector<1x16x32xf32>
    %100 = vector.shape_cast %99 : vector<1x16x32xf32> to vector<16x32xf32>
    %cst_54 = arith.constant dense<0.000000e+00> : vector<8x32xf32>
    %101 = tpu.matmul %98, %100, %cst_54 {dimension_numbers = #tpu.dot_dimension_numbers<[1], [0], [0], [1], [0, 0, 1, 1], [], []>} : vector<8x16xf32>, vector<16x32xf32>, vector<8x32xf32> -> vector<8x32xf32>
    %102 = arith.addf %77, %101 : vector<8x32xf32>
    %103 = vector.extract_strided_slice %74 {offsets = [0, 16], sizes = [8, 16], strides = [1, 1]} : vector<8x32xf32> to vector<8x16xf32>
    %104 = vector.extract_strided_slice %75 {offsets = [0, 16], sizes = [8, 16], strides = [1, 1]} : vector<8x32xf32> to vector<8x16xf32>
    %105 = vector.extract_strided_slice %76 {offsets = [0, 16], sizes = [8, 16], strides = [1, 1]} : vector<8x32xf32> to vector<8x16xf32>
    %cst_55 = arith.constant dense<0.000000e+00> : vector<8x8xf32>
    %106 = tpu.matmul %103, %104, %cst_55 {dimension_numbers = #tpu.dot_dimension_numbers<[1], [1], [0], [0], [0, 0, 1, 0], [], []>} : vector<8x16xf32>, vector<8x16xf32>, vector<8x8xf32> -> vector<8x8xf32>
    %cst_56 = arith.constant 2.500000e-01 : f32
    %107 = vector.broadcast %cst_56 : f32 to vector<8x8xf32>
    %108 = arith.mulf %106, %107 : vector<8x8xf32>
    %cst_57 = arith.constant 5.000000e-01 : f32
    %109 = vector.broadcast %cst_57 : f32 to vector<8x8xf32>
    %110 = arith.cmpf ogt, %73, %109 : vector<8x8xf32>
    %cst_58 = arith.constant -1.000000e+30 : f32
    %111 = vector.broadcast %cst_58 : f32 to vector<8x8xf32>
    %112 = arith.select %110, %111, %108 : vector<8x8xi1>, vector<8x8xf32>
    %cst_59 = arith.constant dense<0xFF800000> : vector<8xf32>
    %113 = vector.multi_reduction <maximumf>, %112, %cst_59 [1] : vector<8x8xf32> to vector<8xf32>
    %114 = vector.shape_cast %113 : vector<8xf32> to vector<8x1xf32>
    %115 = vector.broadcast %114 : vector<8x1xf32> to vector<8x8xf32>
    %116 = arith.subf %112, %115 : vector<8x8xf32>
    %117 = math.exp %116 : vector<8x8xf32>
    %cst_60 = arith.constant dense<0.000000e+00> : vector<8xf32>
    %118 = vector.multi_reduction <add>, %117, %cst_60 [1] : vector<8x8xf32> to vector<8xf32>
    %119 = vector.shape_cast %118 : vector<8xf32> to vector<8x1xf32>
    %120 = tpu.reciprocal %119 : vector<8x1xf32> -> vector<8x1xf32>
    %121 = vector.broadcast %120 : vector<8x1xf32> to vector<8x8xf32>
    %122 = arith.mulf %117, %121 : vector<8x8xf32>
    %cst_61 = arith.constant dense<0.000000e+00> : vector<8x16xf32>
    %123 = tpu.matmul %122, %105, %cst_61 {dimension_numbers = #tpu.dot_dimension_numbers<[1], [0], [0], [1], [0, 0, 1, 1], [], []>} : vector<8x8xf32>, vector<8x16xf32>, vector<8x16xf32> -> vector<8x16xf32>
    %c1_62 = arith.constant 1 : index
    %c0_63 = arith.constant 0 : index
    %c0_64 = arith.constant 0 : index
    %124 = vector.load %arg9[%c1_62, %c0_63, %c0_64] : memref<2x16x32xf32, #tpu.memory_space<vmem>>, vector<1x16x32xf32>
    %125 = vector.shape_cast %124 : vector<1x16x32xf32> to vector<16x32xf32>
    %cst_65 = arith.constant dense<0.000000e+00> : vector<8x32xf32>
    %126 = tpu.matmul %123, %125, %cst_65 {dimension_numbers = #tpu.dot_dimension_numbers<[1], [0], [0], [1], [0, 0, 1, 1], [], []>} : vector<8x16xf32>, vector<16x32xf32>, vector<8x32xf32> -> vector<8x32xf32>
    %127 = arith.addf %102, %126 : vector<8x32xf32>
    %128 = vector.shape_cast %41 : vector<8x8xf32> to vector<1x8x8xf32>
    %129 = vector.shape_cast %97 : vector<8x8xf32> to vector<1x8x8xf32>
    %130 = tpu.concatenate %128, %129 in 0 : vector<1x8x8xf32>, vector<1x8x8xf32> -> vector<2x8x8xf32>
    %131 = vector.shape_cast %66 : vector<8x8xf32> to vector<1x8x8xf32>
    %132 = vector.shape_cast %122 : vector<8x8xf32> to vector<1x8x8xf32>
    %133 = tpu.concatenate %131, %132 in 0 : vector<1x8x8xf32>, vector<1x8x8xf32> -> vector<2x8x8xf32>
    %134 = vector.shape_cast %130 : vector<2x8x8xf32> to vector<1x2x8x8xf32>
    %135 = vector.shape_cast %133 : vector<2x8x8xf32> to vector<1x2x8x8xf32>
    %136 = tpu.concatenate %134, %135 in 0 : vector<1x2x8x8xf32>, vector<1x2x8x8xf32> -> vector<2x2x8x8xf32>
    %c0_66 = arith.constant 0 : index
    %c0_67 = arith.constant 0 : index
    %c0_68 = arith.constant 0 : index
    %c0_69 = arith.constant 0 : index
    %137 = vector.load %arg20[%c0_66, %c0_67, %c0_68, %c0_69] : memref<2x2x8x8xf32, #tpu.memory_space<vmem>>, vector<2x2x8x8xf32>
    tpu.vector_store %arg20[%c0_66, %c0_67, %c0_68, %c0_69], %136 {strides = array<i32>} : memref<2x2x8x8xf32, #tpu.memory_space<vmem>>, vector<2x2x8x8xf32>,
    %138 = tpu.concatenate %71, %127 in 0 : vector<8x32xf32>, vector<8x32xf32> -> vector<16x32xf32>
    %c0_70 = arith.constant 0 : index
    %c0_71 = arith.constant 0 : index
    %139 = vector.load %arg10[%c0_70, %c0_71] : memref<1x32xf32, #tpu.memory_space<vmem>>, vector<1x32xf32>
    %140 = vector.broadcast %139 : vector<1x32xf32> to vector<16x32xf32>
    %141 = arith.addf %138, %140 : vector<16x32xf32>
    %142 = arith.addf %141, %0 : vector<16x32xf32>
    %cst_72 = arith.constant dense<0.000000e+00> : vector<16xf32>
    %143 = vector.multi_reduction <add>, %142, %cst_72 [1] : vector<16x32xf32> to vector<16xf32>
    %144 = vector.shape_cast %143 : vector<16xf32> to vector<16x1xf32>
    %cst_73 = arith.constant 3.200000e+01 : f32
    %145 = vector.broadcast %cst_73 : f32 to vector<16x1xf32>
    %146 = arith.divf %144, %145 : vector<16x1xf32>
    %147 = vector.broadcast %146 : vector<16x1xf32> to vector<16x32xf32>
    %148 = arith.subf %142, %147 : vector<16x32xf32>
    %149 = arith.mulf %148, %148 : vector<16x32xf32>
    %cst_74 = arith.constant dense<0.000000e+00> : vector<16xf32>
    %150 = vector.multi_reduction <add>, %149, %cst_74 [1] : vector<16x32xf32> to vector<16xf32>
    %151 = vector.shape_cast %150 : vector<16xf32> to vector<16x1xf32>
    %cst_75 = arith.constant 3.200000e+01 : f32
    %152 = vector.broadcast %cst_75 : f32 to vector<16x1xf32>
    %153 = arith.divf %151, %152 : vector<16x1xf32>
    %154 = vector.broadcast %146 : vector<16x1xf32> to vector<16x32xf32>
    %155 = arith.subf %142, %154 : vector<16x32xf32>
    %cst_76 = arith.constant 9.99999974E-6 : f32
    %156 = vector.broadcast %cst_76 : f32 to vector<16x1xf32>
    %157 = arith.addf %153, %156 : vector<16x1xf32>
    %158 = math.rsqrt %157 : vector<16x1xf32>
    %159 = vector.broadcast %158 : vector<16x1xf32> to vector<16x32xf32>
    %160 = arith.mulf %155, %159 : vector<16x32xf32>
    %c0_77 = arith.constant 0 : index
    %c0_78 = arith.constant 0 : index
    %161 = vector.load %arg11[%c0_77, %c0_78] : memref<1x32xf32, #tpu.memory_space<vmem>>, vector<1x32xf32>
    %162 = vector.broadcast %161 : vector<1x32xf32> to vector<16x32xf32>
    %163 = arith.mulf %160, %162 : vector<16x32xf32>
    %c0_79 = arith.constant 0 : index
    %c0_80 = arith.constant 0 : index
    %164 = vector.load %arg12[%c0_79, %c0_80] : memref<1x32xf32, #tpu.memory_space<vmem>>, vector<1x32xf32>
    %165 = vector.broadcast %164 : vector<1x32xf32> to vector<16x32xf32>
    %166 = arith.addf %163, %165 : vector<16x32xf32>
    %c0_81 = arith.constant 0 : index
    %c0_82 = arith.constant 0 : index
    %167 = vector.load %arg2[%c0_81, %c0_82] : memref<16x1xf32, #tpu.memory_space<vmem>>, vector<16x1xf32>
    %168 = vector.broadcast %167 : vector<16x1xf32> to vector<16x32xf32>
    %169 = arith.mulf %166, %168 : vector<16x32xf32>
    %c0_83 = arith.constant 0 : index
    %c0_84 = arith.constant 0 : index
    %170 = vector.load %arg13[%c0_83, %c0_84] : memref<32x64xf32, #tpu.memory_space<vmem>>, vector<32x64xf32>
    %cst_85 = arith.constant dense<0.000000e+00> : vector<16x64xf32>
    %171 = tpu.matmul %169, %170, %cst_85 {dimension_numbers = #tpu.dot_dimension_numbers<[1], [0], [0], [1], [0, 0, 1, 1], [], []>} : vector<16x32xf32>, vector<32x64xf32>, vector<16x64xf32> -> vector<16x64xf32>
    %c0_86 = arith.constant 0 : index
    %c0_87 = arith.constant 0 : index
    %172 = vector.load %arg14[%c0_86, %c0_87] : memref<1x64xf32, #tpu.memory_space<vmem>>, vector<1x64xf32>
    %173 = vector.broadcast %172 : vector<1x64xf32> to vector<16x64xf32>
    %174 = arith.addf %171, %173 : vector<16x64xf32>
    %cst_88 = arith.constant 0.000000e+00 : f32
    %175 = vector.broadcast %cst_88 : f32 to vector<16x64xf32>
    %176 = arith.maximumf %174, %175 : vector<16x64xf32>
    %c0_89 = arith.constant 0 : index
    %c0_90 = arith.constant 0 : index
    %177 = vector.load %arg15[%c0_89, %c0_90] : memref<64x32xf32, #tpu.memory_space<vmem>>, vector<64x32xf32>
    %cst_91 = arith.constant dense<0.000000e+00> : vector<16x32xf32>
    %178 = tpu.matmul %176, %177, %cst_91 {dimension_numbers = #tpu.dot_dimension_numbers<[1], [0], [0], [1], [0, 0, 1, 1], [], []>} : vector<16x64xf32>, vector<64x32xf32>, vector<16x32xf32> -> vector<16x32xf32>
    %c0_92 = arith.constant 0 : index
    %c0_93 = arith.constant 0 : index
    %179 = vector.load %arg16[%c0_92, %c0_93] : memref<1x32xf32, #tpu.memory_space<vmem>>, vector<1x32xf32>
    %180 = vector.broadcast %179 : vector<1x32xf32> to vector<16x32xf32>
    %181 = arith.addf %178, %180 : vector<16x32xf32>
    %182 = arith.addf %181, %169 : vector<16x32xf32>
    %cst_94 = arith.constant dense<0.000000e+00> : vector<16xf32>
    %183 = vector.multi_reduction <add>, %182, %cst_94 [1] : vector<16x32xf32> to vector<16xf32>
    %184 = vector.shape_cast %183 : vector<16xf32> to vector<16x1xf32>
    %cst_95 = arith.constant 3.200000e+01 : f32
    %185 = vector.broadcast %cst_95 : f32 to vector<16x1xf32>
    %186 = arith.divf %184, %185 : vector<16x1xf32>
    %187 = vector.broadcast %186 : vector<16x1xf32> to vector<16x32xf32>
    %188 = arith.subf %182, %187 : vector<16x32xf32>
    %189 = arith.mulf %188, %188 : vector<16x32xf32>
    %cst_96 = arith.constant dense<0.000000e+00> : vector<16xf32>
    %190 = vector.multi_reduction <add>, %189, %cst_96 [1] : vector<16x32xf32> to vector<16xf32>
    %191 = vector.shape_cast %190 : vector<16xf32> to vector<16x1xf32>
    %cst_97 = arith.constant 3.200000e+01 : f32
    %192 = vector.broadcast %cst_97 : f32 to vector<16x1xf32>
    %193 = arith.divf %191, %192 : vector<16x1xf32>
    %194 = vector.broadcast %186 : vector<16x1xf32> to vector<16x32xf32>
    %195 = arith.subf %182, %194 : vector<16x32xf32>
    %cst_98 = arith.constant 9.99999974E-6 : f32
    %196 = vector.broadcast %cst_98 : f32 to vector<16x1xf32>
    %197 = arith.addf %193, %196 : vector<16x1xf32>
    %198 = math.rsqrt %197 : vector<16x1xf32>
    %199 = vector.broadcast %198 : vector<16x1xf32> to vector<16x32xf32>
    %200 = arith.mulf %195, %199 : vector<16x32xf32>
    %c0_99 = arith.constant 0 : index
    %c0_100 = arith.constant 0 : index
    %201 = vector.load %arg17[%c0_99, %c0_100] : memref<1x32xf32, #tpu.memory_space<vmem>>, vector<1x32xf32>
    %202 = vector.broadcast %201 : vector<1x32xf32> to vector<16x32xf32>
    %203 = arith.mulf %200, %202 : vector<16x32xf32>
    %c0_101 = arith.constant 0 : index
    %c0_102 = arith.constant 0 : index
    %204 = vector.load %arg18[%c0_101, %c0_102] : memref<1x32xf32, #tpu.memory_space<vmem>>, vector<1x32xf32>
    %205 = vector.broadcast %204 : vector<1x32xf32> to vector<16x32xf32>
    %206 = arith.addf %203, %205 : vector<16x32xf32>
    %207 = vector.broadcast %167 : vector<16x1xf32> to vector<16x32xf32>
    %208 = arith.mulf %206, %207 : vector<16x32xf32>
    %c0_103 = arith.constant 0 : index
    %c0_104 = arith.constant 0 : index
    %209 = vector.load %arg19[%c0_103, %c0_104] : memref<16x32xf32, #tpu.memory_space<vmem>>, vector<16x32xf32>
    tpu.vector_store %arg19[%c0_103, %c0_104], %208 {strides = array<i32>} : memref<16x32xf32, #tpu.memory_space<vmem>>, vector<16x32xf32>,
    return
  }
}

</mosaic_0001>

<llo_original>
// kernel: encoder_layer.1
$region0: #{encoder_layer.1}
  #allocation0 [shape = 'u32[]', space=smem, size = 0x4, offset = 0x4, fixed_abs, tag = 'smem constant byte address 0x4 - core index']
  #allocation1 [shape = 'u32[144,128]{1,0:T(1,128)}', space=vmem, size = 0x12000, scoped, tag = 'internal scratch']
  %s0 = inlined_call_operand.vmem [shape: f32[16,32], index: 0, kind: input, shape index: {}]
  %s1 = inlined_call_operand.vmem [shape: f32[2,8,8], index: 1, kind: input, shape index: {}]
  %s2 = inlined_call_operand.vmem [shape: f32[16,1], index: 2, kind: input, shape index: {}]
  %s3 = inlined_call_operand.vmem [shape: f32[32,32], index: 3, kind: input, shape index: {}]
  %s4 = inlined_call_operand.vmem [shape: f32[1,32], index: 4, kind: input, shape index: {}]
  %s5 = inlined_call_operand.vmem [shape: f32[32,32], index: 5, kind: input, shape index: {}]
  %s6 = inlined_call_operand.vmem [shape: f32[1,32], index: 6, kind: input, shape index: {}]
  %s7 = inlined_call_operand.vmem [shape: f32[32,32], index: 7, kind: input, shape index: {}]
  %s8 = inlined_call_operand.vmem [shape: f32[1,32], index: 8, kind: input, shape index: {}]
  %s9 = inlined_call_operand.vmem [shape: f32[2,16,32], index: 9, kind: input, shape index: {}]
  %s10 = inlined_call_operand.vmem [shape: f32[1,32], index: 10, kind: input, shape index: {}]
  %s11 = inlined_call_operand.vmem [shape: f32[1,32], index: 11, kind: input, shape index: {}]
  %s12 = inlined_call_operand.vmem [shape: f32[1,32], index: 12, kind: input, shape index: {}]
  %s13 = inlined_call_operand.vmem [shape: f32[32,64], index: 13, kind: input, shape index: {}]
  %s14 = inlined_call_operand.vmem [shape: f32[1,64], index: 14, kind: input, shape index: {}]
  %s15 = inlined_call_operand.vmem [shape: f32[64,32], index: 15, kind: input, shape index: {}]
  %s16 = inlined_call_operand.vmem [shape: f32[1,32], index: 16, kind: input, shape index: {}]
  %s17 = inlined_call_operand.vmem [shape: f32[1,32], index: 17, kind: input, shape index: {}]
  %s18 = inlined_call_operand.vmem [shape: f32[1,32], index: 18, kind: input, shape index: {}]
  %s19 = inlined_call_operand.hbm [shape: f32[16,32], index: 19, kind: output, shape index: {0}]
  %s20 = inlined_call_operand.hbm [shape: f32[2,2,8,8], index: 20, kind: output, shape index: {1}]
  %21 = xla_tuple %s19, %s20
  %s22 = sld [smem:[#allocation0]]
  $region94: #{encoder_layer.1} parent=0
    _
  %s24 = ssub.s32 1, %s22
  %s25 = scalar_select 0, %s24, %s22
  $region1: #{encoder_layer.1} parent=0
    #allocation2 [shape = 'u8[8192]{0}', space=vmem, size = 0x2000, scoped, tag = 'output window, operand 0, single buffered']
    #allocation3 [shape = 's32[1]{0}', space=sflag, size = 0x4, scoped, tag = 'scoped memory for encoder_layer.1']
    #allocation4 [shape = 'u8[16384]{0}', space=vmem, size = 0x4000, scoped, tag = 'output window, operand 1, single buffered']
    #allocation5 [shape = 's32[1]{0}', space=sflag, size = 0x4, scoped, tag = 'scoped memory for encoder_layer.1']
    %26 = vsyncpa [#allocation3], 0
    %27 = vsyncpa [#allocation5], 0
    // Predicated region
    $region2: #{encoder_layer.1} parent=1 // pred_check
      _
    $region3: #{encoder_layer.1} parent=1 // pred_check_branch
      %29 = sbr.rel (0) target = $region5
    $region4: #{encoder_layer.1} parent=1 // pred_region
      _
    $region5: #{encoder_layer.1} parent=1 // pred_fallthru
      _
    // Predicated region
    $region6: #{encoder_layer.1} parent=1 // pred_check
      _
    $region7: #{encoder_layer.1} parent=1 // pred_check_branch
      %31 = sbr.rel (0) target = $region9
    $region8: #{encoder_layer.1} parent=1 // pred_region
      _
    $region9: #{encoder_layer.1} parent=1 // pred_fallthru
      _
    // Predicated region
    $region10: #{encoder_layer.1} parent=1 // pred_check
      _
    $region11: #{encoder_layer.1} parent=1 // pred_check_branch
      %33 = sbr.rel (0) target = $region13
    $region12: #{encoder_layer.1} parent=1 // pred_region
      _
    $region13: #{encoder_layer.1} parent=1 // pred_fallthru
      _
    // Predicated region
    $region14: #{encoder_layer.1} parent=1 // pred_check
      _
    $region15: #{encoder_layer.1} parent=1 // pred_check_branch
      %35 = sbr.rel (0) target = $region17
    $region16: #{encoder_layer.1} parent=1 // pred_region
      _
    $region17: #{encoder_layer.1} parent=1 // pred_fallthru
      _
    // Predicated region
    $region18: #{encoder_layer.1} parent=1 // pred_check
      _
    $region19: #{encoder_layer.1} parent=1 // pred_check_branch
      %37 = sbr.rel (0) target = $region21
    $region20: #{encoder_layer.1} parent=1 // pred_region
      _
    $region21: #{encoder_layer.1} parent=1 // pred_fallthru
      _
    // Predicated region
    $region22: #{encoder_layer.1} parent=1 // pred_check
      _
    $region23: #{encoder_layer.1} parent=1 // pred_check_branch
      %39 = sbr.rel (0) target = $region25
    $region24: #{encoder_layer.1} parent=1 // pred_region
      _
    $region25: #{encoder_layer.1} parent=1 // pred_fallthru
      _
    // Predicated region
    $region26: #{encoder_layer.1} parent=1 // pred_check
      _
    $region27: #{encoder_layer.1} parent=1 // pred_check_branch
      %41 = sbr.rel (0) target = $region29
    $region28: #{encoder_layer.1} parent=1 // pred_region
      _
    $region29: #{encoder_layer.1} parent=1 // pred_fallthru
      _
    // Predicated region
    $region30: #{encoder_layer.1} parent=1 // pred_check
      _
    $region31: #{encoder_layer.1} parent=1 // pred_check_branch
      %43 = sbr.rel (0) target = $region33
    $region32: #{encoder_layer.1} parent=1 // pred_region
      _
    $region33: #{encoder_layer.1} parent=1 // pred_fallthru
      _
    // Predicated region
    $region34: #{encoder_layer.1} parent=1 // pred_check
      _
    $region35: #{encoder_layer.1} parent=1 // pred_check_branch
      %45 = sbr.rel (0) target = $region37
    $region36: #{encoder_layer.1} parent=1 // pred_region
      _
    $region37: #{encoder_layer.1} parent=1 // pred_fallthru
      _
    // Predicated region
    $region38: #{encoder_layer.1} parent=1 // pred_check
      _
    $region39: #{encoder_layer.1} parent=1 // pred_check_branch
      %47 = sbr.rel (0) target = $region41
    $region40: #{encoder_layer.1} parent=1 // pred_region
      _
    $region41: #{encoder_layer.1} parent=1 // pred_fallthru
      _
    // Predicated region
    $region42: #{encoder_layer.1} parent=1 // pred_check
      _
    $region43: #{encoder_layer.1} parent=1 // pred_check_branch
      %49 = sbr.rel (0) target = $region45
    $region44: #{encoder_layer.1} parent=1 // pred_region
      _
    $region45: #{encoder_layer.1} parent=1 // pred_fallthru
      _
    // Predicated region
    $region46: #{encoder_layer.1} parent=1 // pred_check
      _
    $region47: #{encoder_layer.1} parent=1 // pred_check_branch
      %51 = sbr.rel (0) target = $region49
    $region48: #{encoder_layer.1} parent=1 // pred_region
      _
    $region49: #{encoder_layer.1} parent=1 // pred_fallthru
      _
    // Predicated region
    $region50: #{encoder_layer.1} parent=1 // pred_check
      _
    $region51: #{encoder_layer.1} parent=1 // pred_check_branch
      %53 = sbr.rel (0) target = $region53
    $region52: #{encoder_layer.1} parent=1 // pred_region
      _
    $region53: #{encoder_layer.1} parent=1 // pred_fallthru
      _
    // Predicated region
    $region54: #{encoder_layer.1} parent=1 // pred_check
      _
    $region55: #{encoder_layer.1} parent=1 // pred_check_branch
      %55 = sbr.rel (0) target = $region57
    $region56: #{encoder_layer.1} parent=1 // pred_region
      _
    $region57: #{encoder_layer.1} parent=1 // pred_fallthru
      _
    // Predicated region
    $region58: #{encoder_layer.1} parent=1 // pred_check
      _
    $region59: #{encoder_layer.1} parent=1 // pred_check_branch
      %57 = sbr.rel (0) target = $region61
    $region60: #{encoder_layer.1} parent=1 // pred_region
      _
    $region61: #{encoder_layer.1} parent=1 // pred_fallthru
      _
    // Predicated region
    $region62: #{encoder_layer.1} parent=1 // pred_check
      _
    $region63: #{encoder_layer.1} parent=1 // pred_check_branch
      %59 = sbr.rel (0) target = $region65
    $region64: #{encoder_layer.1} parent=1 // pred_region
      _
    $region65: #{encoder_layer.1} parent=1 // pred_fallthru
      _
    // Predicated region
    $region66: #{encoder_layer.1} parent=1 // pred_check
      _
    $region67: #{encoder_layer.1} parent=1 // pred_check_branch
      %61 = sbr.rel (0) target = $region69
    $region68: #{encoder_layer.1} parent=1 // pred_region
      _
    $region69: #{encoder_layer.1} parent=1 // pred_fallthru
      _
    // Predicated region
    $region70: #{encoder_layer.1} parent=1 // pred_check
      _
    $region71: #{encoder_layer.1} parent=1 // pred_check_branch
      %63 = sbr.rel (0) target = $region73
    $region72: #{encoder_layer.1} parent=1 // pred_region
      _
    $region73: #{encoder_layer.1} parent=1 // pred_fallthru
      _
    // Predicated region
    $region74: #{encoder_layer.1} parent=1 // pred_check
      _
    $region75: #{encoder_layer.1} parent=1 // pred_check_branch
      %65 = sbr.rel (0) target = $region77
    $region76: #{encoder_layer.1} parent=1 // pred_region
      _
    $region77: #{encoder_layer.1} parent=1 // pred_fallthru
      _
    %v66 = vld [vmem:[%s0] sm:$0xff]
    %v67 = vld [vmem:[%s0 + $0x8] sm:$0xff]
    %v68 = vld [vmem:[%s3] sm:$0xff]
    %v69 = vld [vmem:[%s3 + $0x8] sm:$0xff]
    %v70 = vld [vmem:[%s3 + $0x10] sm:$0xff]
    %v71 = vld [vmem:[%s3 + $0x18] sm:$0xff]
    %v72 = vld [vmem:[%s4] sm:$0x1]
    %v74 = vlaneseq
    %v75 = vshrl.u32 %v74, 7
    %v76 = vsub.s32 0, %v75
    %v77 = vrot.slane %v72, %v76
    %vm79 = vcmask 261120
    %v81 = vsel %vm79, %v66, 0
    %v84 = vsel %vm79, %v67, 0
    %86 = vmatprep.subr.mxu0 0.0
    %87 = vmatpush1.msra.mxu0 %v68
    %88 = vmatprep.subr.mxu0 0.0
    %89 = vmatpush1.msra.mxu0 %v69
    %90 = vmatprep.subr.mxu0 0.0
    %91 = vmatpush1.msra.mxu0 %v70
    %92 = vmatprep.subr.mxu0 0.0
    %93 = vmatpush1.msra.mxu0 %v71
    %94 = vmatprep.subr.mxu0 0.0
    %95 = vmatpush1.msra.mxu0 0.0
    %96 = vmatprep.subr.mxu0 0.0
    %97 = vmatpush1.msra.mxu0 0.0
    %98 = vmatprep.subr.mxu0 0.0
    %99 = vmatpush1.msra.mxu0 0.0
    %100 = vmatprep.subr.mxu0 0.0
    %101 = vmatpush1.msra.mxu0 0.0
    %102 = vmatprep.subr.mxu0 0.0
    %103 = vmatpush1.msra.mxu0 0.0
    %104 = vmatprep.subr.mxu0 0.0
    %105 = vmatpush1.msra.mxu0 0.0
    %106 = vmatprep.subr.mxu0 0.0
    %107 = vmatpush1.msra.mxu0 0.0
    %108 = vmatprep.subr.mxu0 0.0
    %109 = vmatpush1.msra.mxu0 0.0
    %110 = vmatprep.subr.mxu0 0.0
    %111 = vmatpush1.msra.mxu0 0.0
    %112 = vmatprep.subr.mxu0 0.0
    %113 = vmatpush1.msra.mxu0 0.0
    %114 = vmatprep.subr.mxu0 0.0
    %115 = vmatpush1.msra.mxu0 0.0
    %116 = vmatprep.subr.mxu0 0.0
    %117 = vmatpush1.msra.mxu0 0.0
    %118 = vmatprep.subr.mxu0 0.0
    %119 = vmatpush1.msra.mxu0 0.0
    %120 = vmatprep.subr.mxu0 0.0
    %121 = vmatpush1.msra.mxu0 0.0
    %122 = vmatprep.subr.mxu0 0.0
    %123 = vmatpush1.msra.mxu0 0.0
    %124 = vmatprep.subr.mxu0 0.0
    %125 = vmatpush1.msra.mxu0 0.0
    %126 = vmatprep.subr.mxu0 0.0
    %127 = vmatpush1.msra.mxu0 0.0
    %128 = vmatprep.subr.mxu0 0.0
    %129 = vmatpush1.msra.mxu0 0.0
    %130 = vmatprep.subr.mxu0 0.0
    %131 = vmatpush1.msra.mxu0 0.0
    %132 = vmatprep.subr.mxu0 0.0
    %133 = vmatpush1.msra.mxu0 0.0
    %134 = vmatprep.subr.mxu0 0.0
    %135 = vmatpush1.msra.mxu0 0.0
    %136 = vmatprep.subr.mxu0 0.0
    %137 = vmatpush1.msra.mxu0 0.0
    %138 = vmatprep.subr.mxu0 0.0
    %139 = vmatpush1.msra.mxu0 0.0
    %140 = vmatprep.subr.mxu0 0.0
    %141 = vmatpush1.msra.mxu0 0.0
    %142 = vmatprep.subr.mxu0 0.0
    %143 = vmatpush1.msra.mxu0 0.0
    %144 = vmatprep.subr.mxu0 0.0
    %145 = vmatpush1.msra.mxu0 0.0
    %146 = vmatprep.subr.mxu0 0.0
    %147 = vmatpush1.msra.mxu0 0.0
    %148 = vmatprep.subr.mxu0 0.0
    %149 = vmatpush1.msra.mxu0 0.0
    %150 = vmatprep.mubr.f32.mxu0 0.0
    %151 = vmatmul.mubr.f32.gmra.mrb[0].mxu0 %v81
    %v152 = vpop.f32.mrb[0].mxu0
    %v153 = vadd.f32 %v77, %v152
    %v154 = vpop.f32.mrb[0].mxu0
    %155 = vmatprep.mubr.f32.mxu0 0.0
    %156 = vmatmul.mubr.f32.gmra.mrb[0].mxu0 %v84
    %v157 = vpop.f32.mrb[0].mxu0
    %v158 = vadd.f32 %v77, %v157
    %v159 = vpop.f32.mrb[0].mxu0
    %160 = vdwg.mxu0
    %v161 = vld [vmem:[%s5] sm:$0xff]
    %v162 = vld [vmem:[%s5 + $0x8] sm:$0xff]
    %v163 = vld [vmem:[%s5 + $0x10] sm:$0xff]
    %v164 = vld [vmem:[%s5 + $0x18] sm:$0xff]
    %v165 = vld [vmem:[%s6] sm:$0x1]
    %v167 = vlaneseq
    %v168 = vshrl.u32 %v167, 7
    %v169 = vsub.s32 0, %v168
    %v170 = vrot.slane %v165, %v169
    %172 = vmatprep.subr.mxu0 0.0
    %173 = vmatpush1.msra.mxu0 %v161
    %174 = vmatprep.subr.mxu0 0.0
    %175 = vmatpush1.msra.mxu0 %v162
    %176 = vmatprep.subr.mxu0 0.0
    %177 = vmatpush1.msra.mxu0 %v163
    %178 = vmatprep.subr.mxu0 0.0
    %179 = vmatpush1.msra.mxu0 %v164
    %180 = vmatprep.subr.mxu0 0.0
    %181 = vmatpush1.msra.mxu0 0.0
    %182 = vmatprep.subr.mxu0 0.0
    %183 = vmatpush1.msra.mxu0 0.0
    %184 = vmatprep.subr.mxu0 0.0
    %185 = vmatpush1.msra.mxu0 0.0
    %186 = vmatprep.subr.mxu0 0.0
    %187 = vmatpush1.msra.mxu0 0.0
    %188 = vmatprep.subr.mxu0 0.0
    %189 = vmatpush1.msra.mxu0 0.0
    %190 = vmatprep.subr.mxu0 0.0
    %191 = vmatpush1.msra.mxu0 0.0
    %192 = vmatprep.subr.mxu0 0.0
    %193 = vmatpush1.msra.mxu0 0.0
    %194 = vmatprep.subr.mxu0 0.0
    %195 = vmatpush1.msra.mxu0 0.0
    %196 = vmatprep.subr.mxu0 0.0
    %197 = vmatpush1.msra.mxu0 0.0
    %198 = vmatprep.subr.mxu0 0.0
    %199 = vmatpush1.msra.mxu0 0.0
    %200 = vmatprep.subr.mxu0 0.0
    %201 = vmatpush1.msra.mxu0 0.0
    %202 = vmatprep.subr.mxu0 0.0
    %203 = vmatpush1.msra.mxu0 0.0
    %204 = vmatprep.subr.mxu0 0.0
    %205 = vmatpush1.msra.mxu0 0.0
    %206 = vmatprep.subr.mxu0 0.0
    %207 = vmatpush1.msra.mxu0 0.0
    %208 = vmatprep.subr.mxu0 0.0
    %209 = vmatpush1.msra.mxu0 0.0
    %210 = vmatprep.subr.mxu0 0.0
    %211 = vmatpush1.msra.mxu0 0.0
    %212 = vmatprep.subr.mxu0 0.0
    %213 = vmatpush1.msra.mxu0 0.0
    %214 = vmatprep.subr.mxu0 0.0
    %215 = vmatpush1.msra.mxu0 0.0
    %216 = vmatprep.subr.mxu0 0.0
    %217 = vmatpush1.msra.mxu0 0.0
    %218 = vmatprep.subr.mxu0 0.0
    %219 = vmatpush1.msra.mxu0 0.0
    %220 = vmatprep.subr.mxu0 0.0
    %221 = vmatpush1.msra.mxu0 0.0
    %222 = vmatprep.subr.mxu0 0.0
    %223 = vmatpush1.msra.mxu0 0.0
    %224 = vmatprep.subr.mxu0 0.0
    %225 = vmatpush1.msra.mxu0 0.0
    %226 = vmatprep.subr.mxu0 0.0
    %227 = vmatpush1.msra.mxu0 0.0
    %228 = vmatprep.subr.mxu0 0.0
    %229 = vmatpush1.msra.mxu0 0.0
    %230 = vmatprep.subr.mxu0 0.0
    %231 = vmatpush1.msra.mxu0 0.0
    %232 = vmatprep.subr.mxu0 0.0
    %233 = vmatpush1.msra.mxu0 0.0
    %234 = vmatprep.subr.mxu0 0.0
    %235 = vmatpush1.msra.mxu0 0.0
    %236 = vmatprep.mubr.f32.mxu0 0.0
    %237 = vmatmul.mubr.f32.gmra.mrb[0].mxu0 %v81
    %v238 = vpop.f32.mrb[0].mxu0
    %v239 = vadd.f32 %v170, %v238
    %v240 = vpop.f32.mrb[0].mxu0
    %241 = vmatprep.mubr.f32.mxu0 0.0
    %242 = vmatmul.mubr.f32.gmra.mrb[0].mxu0 %v84
    %v243 = vpop.f32.mrb[0].mxu0
    %v244 = vadd.f32 %v170, %v243
    %v245 = vpop.f32.mrb[0].mxu0
    %246 = vdwg.mxu0
    %v247 = vld [vmem:[%s7] sm:$0xff]
    %v248 = vld [vmem:[%s7 + $0x8] sm:$0xff]
    %v249 = vld [vmem:[%s7 + $0x10] sm:$0xff]
    %v250 = vld [vmem:[%s7 + $0x18] sm:$0xff]
    %v251 = vld [vmem:[%s8] sm:$0x1]
    %v253 = vlaneseq
    %v254 = vshrl.u32 %v253, 7
    %v255 = vsub.s32 0, %v254
    %v256 = vrot.slane %v251, %v255
    %258 = vmatprep.subr.mxu0 0.0
    %259 = vmatpush1.msra.mxu0 %v247
    %260 = vmatprep.subr.mxu0 0.0
    %261 = vmatpush1.msra.mxu0 %v248
    %262 = vmatprep.subr.mxu0 0.0
    %263 = vmatpush1.msra.mxu0 %v249
    %264 = vmatprep.subr.mxu0 0.0
    %265 = vmatpush1.msra.mxu0 %v250
    %266 = vmatprep.subr.mxu0 0.0
    %267 = vmatpush1.msra.mxu0 0.0
    %268 = vmatprep.subr.mxu0 0.0
    %269 = vmatpush1.msra.mxu0 0.0
    %270 = vmatprep.subr.mxu0 0.0
    %271 = vmatpush1.msra.mxu0 0.0
    %272 = vmatprep.subr.mxu0 0.0
    %273 = vmatpush1.msra.mxu0 0.0
    %274 = vmatprep.subr.mxu0 0.0
    %275 = vmatpush1.msra.mxu0 0.0
    %276 = vmatprep.subr.mxu0 0.0
    %277 = vmatpush1.msra.mxu0 0.0
    %278 = vmatprep.subr.mxu0 0.0
    %279 = vmatpush1.msra.mxu0 0.0
    %280 = vmatprep.subr.mxu0 0.0
    %281 = vmatpush1.msra.mxu0 0.0
    %282 = vmatprep.subr.mxu0 0.0
    %283 = vmatpush1.msra.mxu0 0.0
    %284 = vmatprep.subr.mxu0 0.0
    %285 = vmatpush1.msra.mxu0 0.0
    %286 = vmatprep.subr.mxu0 0.0
    %287 = vmatpush1.msra.mxu0 0.0
    %288 = vmatprep.subr.mxu0 0.0
    %289 = vmatpush1.msra.mxu0 0.0
    %290 = vmatprep.subr.mxu0 0.0
    %291 = vmatpush1.msra.mxu0 0.0
    %292 = vmatprep.subr.mxu0 0.0
    %293 = vmatpush1.msra.mxu0 0.0
    %294 = vmatprep.subr.mxu0 0.0
    %295 = vmatpush1.msra.mxu0 0.0
    %296 = vmatprep.subr.mxu0 0.0
    %297 = vmatpush1.msra.mxu0 0.0
    %298 = vmatprep.subr.mxu0 0.0
    %299 = vmatpush1.msra.mxu0 0.0
    %300 = vmatprep.subr.mxu0 0.0
    %301 = vmatpush1.msra.mxu0 0.0
    %302 = vmatprep.subr.mxu0 0.0
    %303 = vmatpush1.msra.mxu0 0.0
    %304 = vmatprep.subr.mxu0 0.0
    %305 = vmatpush1.msra.mxu0 0.0
    %306 = vmatprep.subr.mxu0 0.0
    %307 = vmatpush1.msra.mxu0 0.0
    %308 = vmatprep.subr.mxu0 0.0
    %309 = vmatpush1.msra.mxu0 0.0
    %310 = vmatprep.subr.mxu0 0.0
    %311 = vmatpush1.msra.mxu0 0.0
    %312 = vmatprep.subr.mxu0 0.0
    %313 = vmatpush1.msra.mxu0 0.0
    %314 = vmatprep.subr.mxu0 0.0
    %315 = vmatpush1.msra.mxu0 0.0
    %316 = vmatprep.subr.mxu0 0.0
    %317 = vmatpush1.msra.mxu0 0.0
    %318 = vmatprep.subr.mxu0 0.0
    %319 = vmatpush1.msra.mxu0 0.0
    %320 = vmatprep.subr.mxu0 0.0
    %321 = vmatpush1.msra.mxu0 0.0
    %322 = vmatprep.mubr.f32.mxu0 0.0
    %323 = vmatmul.mubr.f32.gmra.mrb[0].mxu0 %v81
    %v324 = vpop.f32.mrb[0].mxu0
    %v325 = vadd.f32 %v256, %v324
    %v326 = vpop.f32.mrb[0].mxu0
    %327 = vmatprep.mubr.f32.mxu0 0.0
    %328 = vmatmul.mubr.f32.gmra.mrb[0].mxu0 %v84
    %v329 = vpop.f32.mrb[0].mxu0
    %v330 = vadd.f32 %v256, %v329
    %v331 = vpop.f32.mrb[0].mxu0
    %332 = vdwg.mxu0
    %v333 = vld [vmem:[%s1] sm:$0xff]
    %vm334 = vcmask 130048
    %v336 = vsel %vm334, %v153, 0
    %v339 = vsel %vm334, %v239, 0
    %341 = vmatprep.subr.mxu0 0.0
    %342 = vmatpush1.xpose.msra.mxu0 %v339
    %343 = vmatprep.subr.mxu0 0.0
    %344 = vmatpush1.xpose.msra.mxu0 0.0
    %345 = vmatprep.subr.mxu0 0.0
    %346 = vmatpush1.xpose.msra.mxu0 0.0
    %347 = vmatprep.subr.mxu0 0.0
    %348 = vmatpush1.xpose.msra.mxu0 0.0
    %349 = vmatprep.subr.mxu0 0.0
    %350 = vmatpush1.xpose.msra.mxu0 0.0
    %351 = vmatprep.subr.mxu0 0.0
    %352 = vmatpush1.xpose.msra.mxu0 0.0
    %353 = vmatprep.subr.mxu0 0.0
    %354 = vmatpush1.xpose.msra.mxu0 0.0
    %355 = vmatprep.subr.mxu0 0.0
    %356 = vmatpush1.xpose.msra.mxu0 0.0
    %357 = vmatprep.subr.mxu0 0.0
    %358 = vmatpush1.xpose.msra.mxu0 0.0
    %359 = vmatprep.subr.mxu0 0.0
    %360 = vmatpush1.xpose.msra.mxu0 0.0
    %361 = vmatprep.subr.mxu0 0.0
    %362 = vmatpush1.xpose.msra.mxu0 0.0
    %363 = vmatprep.subr.mxu0 0.0
    %364 = vmatpush1.xpose.msra.mxu0 0.0
    %365 = vmatprep.subr.mxu0 0.0
    %366 = vmatpush1.xpose.msra.mxu0 0.0
    %367 = vmatprep.subr.mxu0 0.0
    %368 = vmatpush1.xpose.msra.mxu0 0.0
    %369 = vmatprep.subr.mxu0 0.0
    %370 = vmatpush1.xpose.msra.mxu0 0.0
    %371 = vmatprep.subr.mxu0 0.0
    %372 = vmatpush1.xpose.msra.mxu0 0.0
    %373 = vmatprep.subr.mxu0 0.0
    %374 = vmatpush1.xpose.msra.mxu0 0.0
    %375 = vmatprep.subr.mxu0 0.0
    %376 = vmatpush1.xpose.msra.mxu0 0.0
    %377 = vmatprep.subr.mxu0 0.0
    %378 = vmatpush1.xpose.msra.mxu0 0.0
    %379 = vmatprep.subr.mxu0 0.0
    %380 = vmatpush1.xpose.msra.mxu0 0.0
    %381 = vmatprep.subr.mxu0 0.0
    %382 = vmatpush1.xpose.msra.mxu0 0.0
    %383 = vmatprep.subr.mxu0 0.0
    %384 = vmatpush1.xpose.msra.mxu0 0.0
    %385 = vmatprep.subr.mxu0 0.0
    %386 = vmatpush1.xpose.msra.mxu0 0.0
    %387 = vmatprep.subr.mxu0 0.0
    %388 = vmatpush1.xpose.msra.mxu0 0.0
    %389 = vmatprep.subr.mxu0 0.0
    %390 = vmatpush1.xpose.msra.mxu0 0.0
    %391 = vmatprep.subr.mxu0 0.0
    %392 = vmatpush1.xpose.msra.mxu0 0.0
    %393 = vmatprep.subr.mxu0 0.0
    %394 = vmatpush1.xpose.msra.mxu0 0.0
    %395 = vmatprep.subr.mxu0 0.0
    %396 = vmatpush1.xpose.msra.mxu0 0.0
    %397 = vmatprep.subr.mxu0 0.0
    %398 = vmatpush1.xpose.msra.mxu0 0.0
    %399 = vmatprep.subr.mxu0 0.0
    %400 = vmatpush1.xpose.msra.mxu0 0.0
    %401 = vmatprep.subr.mxu0 0.0
    %402 = vmatpush1.xpose.msra.mxu0 0.0
    %403 = vmatprep.subr.mxu0 0.0
    %404 = vmatpush1.xpose.msra.mxu0 0.0
    %405 = vmatprep.mubr.f32.mxu0 0.0
    %406 = vmatmul.mubr.f32.gmra.mrb[0].mxu0 %v336
    %v407 = vpop.f32.mrb[0].mxu0
    %v408 = vadd.f32 0.0, %v407
    %v409 = vpop.f32.mrb[0].mxu0
    %410 = vdwg.mxu0
    %v411 = vmul.f32 %v408, 0.25
    %vm412 = vcmp.gt.f32.partialorder %v333, 0.5
    %v413 = vsel %vm412, -1e+30, %v411
    %vm414 = vcmask 64512
    %v415 = vsel %vm414, %v413, -inf
    %416 = vmax.xlane.f32.xlu0 %v415
    %v417 = vpop.xlane.xlu0 %416
    %v418 = vsub.f32 %v413, %v417
    %v419 = vmul.f32 %v418, 1.442695
    %v420 = vpow.pop %v419
    %v421 = vsel %vm414, %v420, 0.0
    %422 = vadd.xlane.f32.xlu0 %v421
    %v423 = vpop.xlane.xlu0 %422
    %v424 = vrcp.pop %v423
    %v425 = vmul.f32 %v420, %v424
    %v427 = vsel %vm414, %v425, 0
    %429 = vmatprep.subr.mxu0 0.0
    %430 = vmatpush1.msra.mxu0 %v325
    %431 = vmatprep.subr.mxu0 0.0
    %432 = vmatpush1.msra.mxu0 0.0
    %433 = vmatprep.subr.mxu0 0.0
    %434 = vmatpush1.msra.mxu0 0.0
    %435 = vmatprep.subr.mxu0 0.0
    %436 = vmatpush1.msra.mxu0 0.0
    %437 = vmatprep.subr.mxu0 0.0
    %438 = vmatpush1.msra.mxu0 0.0
    %439 = vmatprep.subr.mxu0 0.0
    %440 = vmatpush1.msra.mxu0 0.0
    %441 = vmatprep.subr.mxu0 0.0
    %442 = vmatpush1.msra.mxu0 0.0
    %443 = vmatprep.subr.mxu0 0.0
    %444 = vmatpush1.msra.mxu0 0.0
    %445 = vmatprep.subr.mxu0 0.0
    %446 = vmatpush1.msra.mxu0 0.0
    %447 = vmatprep.subr.mxu0 0.0
    %448 = vmatpush1.msra.mxu0 0.0
    %449 = vmatprep.subr.mxu0 0.0
    %450 = vmatpush1.msra.mxu0 0.0
    %451 = vmatprep.subr.mxu0 0.0
    %452 = vmatpush1.msra.mxu0 0.0
    %453 = vmatprep.subr.mxu0 0.0
    %454 = vmatpush1.msra.mxu0 0.0
    %455 = vmatprep.subr.mxu0 0.0
    %456 = vmatpush1.msra.mxu0 0.0
    %457 = vmatprep.subr.mxu0 0.0
    %458 = vmatpush1.msra.mxu0 0.0
    %459 = vmatprep.subr.mxu0 0.0
    %460 = vmatpush1.msra.mxu0 0.0
    %461 = vmatprep.subr.mxu0 0.0
    %462 = vmatpush1.msra.mxu0 0.0
    %463 = vmatprep.subr.mxu0 0.0
    %464 = vmatpush1.msra.mxu0 0.0
    %465 = vmatprep.subr.mxu0 0.0
    %466 = vmatpush1.msra.mxu0 0.0
    %467 = vmatprep.subr.mxu0 0.0
    %468 = vmatpush1.msra.mxu0 0.0
    %469 = vmatprep.subr.mxu0 0.0
    %470 = vmatpush1.msra.mxu0 0.0
    %471 = vmatprep.subr.mxu0 0.0
    %472 = vmatpush1.msra.mxu0 0.0
    %473 = vmatprep.subr.mxu0 0.0
    %474 = vmatpush1.msra.mxu0 0.0
    %475 = vmatprep.subr.mxu0 0.0
    %476 = vmatpush1.msra.mxu0 0.0
    %477 = vmatprep.subr.mxu0 0.0
    %478 = vmatpush1.msra.mxu0 0.0
    %479 = vmatprep.subr.mxu0 0.0
    %480 = vmatpush1.msra.mxu0 0.0
    %481 = vmatprep.subr.mxu0 0.0
    %482 = vmatpush1.msra.mxu0 0.0
    %483 = vmatprep.subr.mxu0 0.0
    %484 = vmatpush1.msra.mxu0 0.0
    %485 = vmatprep.subr.mxu0 0.0
    %486 = vmatpush1.msra.mxu0 0.0
    %487 = vmatprep.subr.mxu0 0.0
    %488 = vmatpush1.msra.mxu0 0.0
    %489 = vmatprep.subr.mxu0 0.0
    %490 = vmatpush1.msra.mxu0 0.0
    %491 = vmatprep.subr.mxu0 0.0
    %492 = vmatpush1.msra.mxu0 0.0
    %493 = vmatprep.mubr.f32.mxu0 0.0
    %494 = vmatmul.mubr.f32.gmra.mrb[0].mxu0 %v427
    %v495 = vpop.f32.mrb[0].mxu0
    %v496 = vadd.f32 0.0, %v495
    %v497 = vpop.f32.mrb[0].mxu0
    %498 = vdwg.mxu0
    %v499 = vld [vmem:[%s9] sm:$0xff]
    %v500 = vld [vmem:[%s9 + $0x8] sm:$0xff]
    %501 = vrot.lane.b32.xlu0 %v153, 112
    %v502 = vpop.permute.xlu0 %501
    %503 = vrot.lane.b32.xlu0 %v239, 112
    %v504 = vpop.permute.xlu0 %503
    %v505 = vsel %vm334, %v502, 0
    %v507 = vsel %vm334, %v504, 0
    %509 = vmatprep.subr.mxu0 0.0
    %510 = vmatpush1.xpose.msra.mxu0 %v507
    %511 = vmatprep.subr.mxu0 0.0
    %512 = vmatpush1.xpose.msra.mxu0 0.0
    %513 = vmatprep.subr.mxu0 0.0
    %514 = vmatpush1.xpose.msra.mxu0 0.0
    %515 = vmatprep.subr.mxu0 0.0
    %516 = vmatpush1.xpose.msra.mxu0 0.0
    %517 = vmatprep.subr.mxu0 0.0
    %518 = vmatpush1.xpose.msra.mxu0 0.0
    %519 = vmatprep.subr.mxu0 0.0
    %520 = vmatpush1.xpose.msra.mxu0 0.0
    %521 = vmatprep.subr.mxu0 0.0
    %522 = vmatpush1.xpose.msra.mxu0 0.0
    %523 = vmatprep.subr.mxu0 0.0
    %524 = vmatpush1.xpose.msra.mxu0 0.0
    %525 = vmatprep.subr.mxu0 0.0
    %526 = vmatpush1.xpose.msra.mxu0 0.0
    %527 = vmatprep.subr.mxu0 0.0
    %528 = vmatpush1.xpose.msra.mxu0 0.0
    %529 = vmatprep.subr.mxu0 0.0
    %530 = vmatpush1.xpose.msra.mxu0 0.0
    %531 = vmatprep.subr.mxu0 0.0
    %532 = vmatpush1.xpose.msra.mxu0 0.0
    %533 = vmatprep.subr.mxu0 0.0
    %534 = vmatpush1.xpose.msra.mxu0 0.0
    %535 = vmatprep.subr.mxu0 0.0
    %536 = vmatpush1.xpose.msra.mxu0 0.0
    %537 = vmatprep.subr.mxu0 0.0
    %538 = vmatpush1.xpose.msra.mxu0 0.0
    %539 = vmatprep.subr.mxu0 0.0
    %540 = vmatpush1.xpose.msra.mxu0 0.0
    %541 = vmatprep.subr.mxu0 0.0
    %542 = vmatpush1.xpose.msra.mxu0 0.0
    %543 = vmatprep.subr.mxu0 0.0
    %544 = vmatpush1.xpose.msra.mxu0 0.0
    %545 = vmatprep.subr.mxu0 0.0
    %546 = vmatpush1.xpose.msra.mxu0 0.0
    %547 = vmatprep.subr.mxu0 0.0
    %548 = vmatpush1.xpose.msra.mxu0 0.0
    %549 = vmatprep.subr.mxu0 0.0
    %550 = vmatpush1.xpose.msra.mxu0 0.0
    %551 = vmatprep.subr.mxu0 0.0
    %552 = vmatpush1.xpose.msra.mxu0 0.0
    %553 = vmatprep.subr.mxu0 0.0
    %554 = vmatpush1.xpose.msra.mxu0 0.0
    %555 = vmatprep.subr.mxu0 0.0
    %556 = vmatpush1.xpose.msra.mxu0 0.0
    %557 = vmatprep.subr.mxu0 0.0
    %558 = vmatpush1.xpose.msra.mxu0 0.0
    %559 = vmatprep.subr.mxu0 0.0
    %560 = vmatpush1.xpose.msra.mxu0 0.0
    %561 = vmatprep.subr.mxu0 0.0
    %562 = vmatpush1.xpose.msra.mxu0 0.0
    %563 = vmatprep.subr.mxu0 0.0
    %564 = vmatpush1.xpose.msra.mxu0 0.0
    %565 = vmatprep.subr.mxu0 0.0
    %566 = vmatpush1.xpose.msra.mxu0 0.0
    %567 = vmatprep.subr.mxu0 0.0
    %568 = vmatpush1.xpose.msra.mxu0 0.0
    %569 = vmatprep.subr.mxu0 0.0
    %570 = vmatpush1.xpose.msra.mxu0 0.0
    %571 = vmatprep.subr.mxu0 0.0
    %572 = vmatpush1.xpose.msra.mxu0 0.0
    %573 = vmatprep.mubr.f32.mxu0 0.0
    %574 = vmatmul.mubr.f32.gmra.mrb[0].mxu0 %v505
    %v575 = vpop.f32.mrb[0].mxu0
    %v576 = vadd.f32 0.0, %v575
    %v577 = vpop.f32.mrb[0].mxu0
    %578 = vdwg.mxu0
    %v579 = vmul.f32 %v576, 0.25
    %v580 = vsel %vm412, -1e+30, %v579
    %v581 = vsel %vm414, %v580, -inf
    %582 = vmax.xlane.f32.xlu0 %v581
    %v583 = vpop.xlane.xlu0 %582
    %v584 = vsub.f32 %v580, %v583
    %v585 = vmul.f32 %v584, 1.442695
    %v586 = vpow.pop %v585
    %v587 = vsel %vm414, %v586, 0.0
    %588 = vadd.xlane.f32.xlu0 %v587
    %v589 = vpop.xlane.xlu0 %588
    %v590 = vrcp.pop %v589
    %v591 = vmul.f32 %v586, %v590
    %593 = vrot.lane.b32.xlu0 %v325, 112
    %v594 = vpop.permute.xlu0 %593
    %v597 = vsel %vm414, %v591, 0
    %599 = vmatprep.subr.mxu0 0.0
    %600 = vmatpush1.msra.mxu0 %v594
    %601 = vmatprep.subr.mxu0 0.0
    %602 = vmatpush1.msra.mxu0 0.0
    %603 = vmatprep.subr.mxu0 0.0
    %604 = vmatpush1.msra.mxu0 0.0
    %605 = vmatprep.subr.mxu0 0.0
    %606 = vmatpush1.msra.mxu0 0.0
    %607 = vmatprep.subr.mxu0 0.0
    %608 = vmatpush1.msra.mxu0 0.0
    %609 = vmatprep.subr.mxu0 0.0
    %610 = vmatpush1.msra.mxu0 0.0
    %611 = vmatprep.subr.mxu0 0.0
    %612 = vmatpush1.msra.mxu0 0.0
    %613 = vmatprep.subr.mxu0 0.0
    %614 = vmatpush1.msra.mxu0 0.0
    %615 = vmatprep.subr.mxu0 0.0
    %616 = vmatpush1.msra.mxu0 0.0
    %617 = vmatprep.subr.mxu0 0.0
    %618 = vmatpush1.msra.mxu0 0.0
    %619 = vmatprep.subr.mxu0 0.0
    %620 = vmatpush1.msra.mxu0 0.0
    %621 = vmatprep.subr.mxu0 0.0
    %622 = vmatpush1.msra.mxu0 0.0
    %623 = vmatprep.subr.mxu0 0.0
    %624 = vmatpush1.msra.mxu0 0.0
    %625 = vmatprep.subr.mxu0 0.0
    %626 = vmatpush1.msra.mxu0 0.0
    %627 = vmatprep.subr.mxu0 0.0
    %628 = vmatpush1.msra.mxu0 0.0
    %629 = vmatprep.subr.mxu0 0.0
    %630 = vmatpush1.msra.mxu0 0.0
    %631 = vmatprep.subr.mxu0 0.0
    %632 = vmatpush1.msra.mxu0 0.0
    %633 = vmatprep.subr.mxu0 0.0
    %634 = vmatpush1.msra.mxu0 0.0
    %635 = vmatprep.subr.mxu0 0.0
    %636 = vmatpush1.msra.mxu0 0.0
    %637 = vmatprep.subr.mxu0 0.0
    %638 = vmatpush1.msra.mxu0 0.0
    %639 = vmatprep.subr.mxu0 0.0
    %640 = vmatpush1.msra.mxu0 0.0
    %641 = vmatprep.subr.mxu0 0.0
    %642 = vmatpush1.msra.mxu0 0.0
    %643 = vmatprep.subr.mxu0 0.0
    %644 = vmatpush1.msra.mxu0 0.0
    %645 = vmatprep.subr.mxu0 0.0
    %646 = vmatpush1.msra.mxu0 0.0
    %647 = vmatprep.subr.mxu0 0.0
    %648 = vmatpush1.msra.mxu0 0.0
    %649 = vmatprep.subr.mxu0 0.0
    %650 = vmatpush1.msra.mxu0 0.0
    %651 = vmatprep.subr.mxu0 0.0
    %652 = vmatpush1.msra.mxu0 0.0
    %653 = vmatprep.subr.mxu0 0.0
    %654 = vmatpush1.msra.mxu0 0.0
    %655 = vmatprep.subr.mxu0 0.0
    %656 = vmatpush1.msra.mxu0 0.0
    %657 = vmatprep.subr.mxu0 0.0
    %658 = vmatpush1.msra.mxu0 0.0
    %659 = vmatprep.subr.mxu0 0.0
    %660 = vmatpush1.msra.mxu0 0.0
    %661 = vmatprep.subr.mxu0 0.0
    %662 = vmatpush1.msra.mxu0 0.0
    %663 = vmatprep.mubr.f32.mxu0 0.0
    %664 = vmatmul.mubr.f32.gmra.mrb[0].mxu0 %v597
    %v665 = vpop.f32.mrb[0].mxu0
    %v666 = vadd.f32 0.0, %v665
    %v667 = vpop.f32.mrb[0].mxu0
    %668 = vdwg.mxu0
    %s669 = scalar_lea.vmem %s9, 16
    %v670 = vld [vmem:[%s669] sm:$0xff]
    %v671 = vld [vmem:[%s669 + $0x8] sm:$0xff]
    %v673 = vsel %vm334, %v666, 0
    %675 = vmatprep.subr.mxu0 0.0
    %676 = vmatpush1.msra.mxu0 %v670
    %677 = vmatprep.subr.mxu0 0.0
    %678 = vmatpush1.msra.mxu0 %v671
    %679 = vmatprep.subr.mxu0 0.0
    %680 = vmatpush1.msra.mxu0 0.0
    %681 = vmatprep.subr.mxu0 0.0
    %682 = vmatpush1.msra.mxu0 0.0
    %683 = vmatprep.subr.mxu0 0.0
    %684 = vmatpush1.msra.mxu0 0.0
    %685 = vmatprep.subr.mxu0 0.0
    %686 = vmatpush1.msra.mxu0 0.0
    %687 = vmatprep.subr.mxu0 0.0
    %688 = vmatpush1.msra.mxu0 0.0
    %689 = vmatprep.subr.mxu0 0.0
    %690 = vmatpush1.msra.mxu0 0.0
    %691 = vmatprep.subr.mxu0 0.0
    %692 = vmatpush1.msra.mxu0 0.0
    %693 = vmatprep.subr.mxu0 0.0
    %694 = vmatpush1.msra.mxu0 0.0
    %695 = vmatprep.subr.mxu0 0.0
    %696 = vmatpush1.msra.mxu0 0.0
    %697 = vmatprep.subr.mxu0 0.0
    %698 = vmatpush1.msra.mxu0 0.0
    %699 = vmatprep.subr.mxu0 0.0
    %700 = vmatpush1.msra.mxu0 0.0
    %701 = vmatprep.subr.mxu0 0.0
    %702 = vmatpush1.msra.mxu0 0.0
    %703 = vmatprep.subr.mxu0 0.0
    %704 = vmatpush1.msra.mxu0 0.0
    %705 = vmatprep.subr.mxu0 0.0
    %706 = vmatpush1.msra.mxu0 0.0
    %707 = vmatprep.subr.mxu0 0.0
    %708 = vmatpush1.msra.mxu0 0.0
    %709 = vmatprep.subr.mxu0 0.0
    %710 = vmatpush1.msra.mxu0 0.0
    %711 = vmatprep.subr.mxu0 0.0
    %712 = vmatpush1.msra.mxu0 0.0
    %713 = vmatprep.subr.mxu0 0.0
    %714 = vmatpush1.msra.mxu0 0.0
    %715 = vmatprep.subr.mxu0 0.0
    %716 = vmatpush1.msra.mxu0 0.0
    %717 = vmatprep.subr.mxu0 0.0
    %718 = vmatpush1.msra.mxu0 0.0
    %719 = vmatprep.subr.mxu0 0.0
    %720 = vmatpush1.msra.mxu0 0.0
    %721 = vmatprep.subr.mxu0 0.0
    %722 = vmatpush1.msra.mxu0 0.0
    %723 = vmatprep.subr.mxu0 0.0
    %724 = vmatpush1.msra.mxu0 0.0
    %725 = vmatprep.subr.mxu0 0.0
    %726 = vmatpush1.msra.mxu0 0.0
    %727 = vmatprep.subr.mxu0 0.0
    %728 = vmatpush1.msra.mxu0 0.0
    %729 = vmatprep.subr.mxu0 0.0
    %730 = vmatpush1.msra.mxu0 0.0
    %731 = vmatprep.subr.mxu0 0.0
    %732 = vmatpush1.msra.mxu0 0.0
    %733 = vmatprep.subr.mxu0 0.0
    %734 = vmatpush1.msra.mxu0 0.0
    %735 = vmatprep.subr.mxu0 0.0
    %736 = vmatpush1.msra.mxu0 0.0
    %737 = vmatprep.subr.mxu0 0.0
    %738 = vmatpush1.msra.mxu0 0.0
    %739 = vmatprep.mubr.f32.mxu0 0.0
    %740 = vmatmul.mubr.f32.gmra.mrb[0].mxu0 %v673
    %v741 = vpop.f32.mrb[0].mxu0
    %v742 = vadd.f32 0.0, %v741
    %v743 = vpop.f32.mrb[0].mxu0
    %744 = vdwg.mxu0
    %v746 = vsel %vm334, %v496, 0
    %748 = vmatprep.subr.mxu0 0.0
    %749 = vmatpush1.msra.mxu0 %v499
    %750 = vmatprep.subr.mxu0 0.0
    %751 = vmatpush1.msra.mxu0 %v500
    %752 = vmatprep.subr.mxu0 0.0
    %753 = vmatpush1.msra.mxu0 0.0
    %754 = vmatprep.subr.mxu0 0.0
    %755 = vmatpush1.msra.mxu0 0.0
    %756 = vmatprep.subr.mxu0 0.0
    %757 = vmatpush1.msra.mxu0 0.0
    %758 = vmatprep.subr.mxu0 0.0
    %759 = vmatpush1.msra.mxu0 0.0
    %760 = vmatprep.subr.mxu0 0.0
    %761 = vmatpush1.msra.mxu0 0.0
    %762 = vmatprep.subr.mxu0 0.0
    %763 = vmatpush1.msra.mxu0 0.0
    %764 = vmatprep.subr.mxu0 0.0
    %765 = vmatpush1.msra.mxu0 0.0
    %766 = vmatprep.subr.mxu0 0.0
    %767 = vmatpush1.msra.mxu0 0.0
    %768 = vmatprep.subr.mxu0 0.0
    %769 = vmatpush1.msra.mxu0 0.0
    %770 = vmatprep.subr.mxu0 0.0
    %771 = vmatpush1.msra.mxu0 0.0
    %772 = vmatprep.subr.mxu0 0.0
    %773 = vmatpush1.msra.mxu0 0.0
    %774 = vmatprep.subr.mxu0 0.0
    %775 = vmatpush1.msra.mxu0 0.0
    %776 = vmatprep.subr.mxu0 0.0
    %777 = vmatpush1.msra.mxu0 0.0
    %778 = vmatprep.subr.mxu0 0.0
    %779 = vmatpush1.msra.mxu0 0.0
    %780 = vmatprep.subr.mxu0 0.0
    %781 = vmatpush1.msra.mxu0 0.0
    %782 = vmatprep.subr.mxu0 0.0
    %783 = vmatpush1.msra.mxu0 0.0
    %784 = vmatprep.subr.mxu0 0.0
    %785 = vmatpush1.msra.mxu0 0.0
    %786 = vmatprep.subr.mxu0 0.0
    %787 = vmatpush1.msra.mxu0 0.0
    %788 = vmatprep.subr.mxu0 0.0
    %789 = vmatpush1.msra.mxu0 0.0
    %790 = vmatprep.subr.mxu0 0.0
    %791 = vmatpush1.msra.mxu0 0.0
    %792 = vmatprep.subr.mxu0 0.0
    %793 = vmatpush1.msra.mxu0 0.0
    %794 = vmatprep.subr.mxu0 0.0
    %795 = vmatpush1.msra.mxu0 0.0
    %796 = vmatprep.subr.mxu0 0.0
    %797 = vmatpush1.msra.mxu0 0.0
    %798 = vmatprep.subr.mxu0 0.0
    %799 = vmatpush1.msra.mxu0 0.0
    %800 = vmatprep.subr.mxu0 0.0
    %801 = vmatpush1.msra.mxu0 0.0
    %802 = vmatprep.subr.mxu0 0.0
    %803 = vmatpush1.msra.mxu0 0.0
    %804 = vmatprep.subr.mxu0 0.0
    %805 = vmatpush1.msra.mxu0 0.0
    %806 = vmatprep.subr.mxu0 0.0
    %807 = vmatpush1.msra.mxu0 0.0
    %808 = vmatprep.subr.mxu0 0.0
    %809 = vmatpush1.msra.mxu0 0.0
    %810 = vmatprep.subr.mxu0 0.0
    %811 = vmatpush1.msra.mxu0 0.0
    %812 = vmatprep.mubr.f32.mxu0 0.0
    %813 = vmatmul.mubr.f32.gmra.mrb[0].mxu0 %v746
    %v814 = vpop.f32.mrb[0].mxu0
    %v815 = vadd.f32 %v742, %v814
    %v816 = vpop.f32.mrb[0].mxu0
    %817 = vdwg.mxu0
    %s818 = scalar_lea.vmem %s1, 8
    %v819 = vld [vmem:[%s818] sm:$0xff]
    %v821 = vsel %vm334, %v158, 0
    %v824 = vsel %vm334, %v244, 0
    %826 = vmatprep.subr.mxu0 0.0
    %827 = vmatpush1.xpose.msra.mxu0 %v824
    %828 = vmatprep.subr.mxu0 0.0
    %829 = vmatpush1.xpose.msra.mxu0 0.0
    %830 = vmatprep.subr.mxu0 0.0
    %831 = vmatpush1.xpose.msra.mxu0 0.0
    %832 = vmatprep.subr.mxu0 0.0
    %833 = vmatpush1.xpose.msra.mxu0 0.0
    %834 = vmatprep.subr.mxu0 0.0
    %835 = vmatpush1.xpose.msra.mxu0 0.0
    %836 = vmatprep.subr.mxu0 0.0
    %837 = vmatpush1.xpose.msra.mxu0 0.0
    %838 = vmatprep.subr.mxu0 0.0
    %839 = vmatpush1.xpose.msra.mxu0 0.0
    %840 = vmatprep.subr.mxu0 0.0
    %841 = vmatpush1.xpose.msra.mxu0 0.0
    %842 = vmatprep.subr.mxu0 0.0
    %843 = vmatpush1.xpose.msra.mxu0 0.0
    %844 = vmatprep.subr.mxu0 0.0
    %845 = vmatpush1.xpose.msra.mxu0 0.0
    %846 = vmatprep.subr.mxu0 0.0
    %847 = vmatpush1.xpose.msra.mxu0 0.0
    %848 = vmatprep.subr.mxu0 0.0
    %849 = vmatpush1.xpose.msra.mxu0 0.0
    %850 = vmatprep.subr.mxu0 0.0
    %851 = vmatpush1.xpose.msra.mxu0 0.0
    %852 = vmatprep.subr.mxu0 0.0
    %853 = vmatpush1.xpose.msra.mxu0 0.0
    %854 = vmatprep.subr.mxu0 0.0
    %855 = vmatpush1.xpose.msra.mxu0 0.0
    %856 = vmatprep.subr.mxu0 0.0
    %857 = vmatpush1.xpose.msra.mxu0 0.0
    %858 = vmatprep.subr.mxu0 0.0
    %859 = vmatpush1.xpose.msra.mxu0 0.0
    %860 = vmatprep.subr.mxu0 0.0
    %861 = vmatpush1.xpose.msra.mxu0 0.0
    %862 = vmatprep.subr.mxu0 0.0
    %863 = vmatpush1.xpose.msra.mxu0 0.0
    %864 = vmatprep.subr.mxu0 0.0
    %865 = vmatpush1.xpose.msra.mxu0 0.0
    %866 = vmatprep.subr.mxu0 0.0
    %867 = vmatpush1.xpose.msra.mxu0 0.0
    %868 = vmatprep.subr.mxu0 0.0
    %869 = vmatpush1.xpose.msra.mxu0 0.0
    %870 = vmatprep.subr.mxu0 0.0
    %871 = vmatpush1.xpose.msra.mxu0 0.0
    %872 = vmatprep.subr.mxu0 0.0
    %873 = vmatpush1.xpose.msra.mxu0 0.0
    %874 = vmatprep.subr.mxu0 0.0
    %875 = vmatpush1.xpose.msra.mxu0 0.0
    %876 = vmatprep.subr.mxu0 0.0
    %877 = vmatpush1.xpose.msra.mxu0 0.0
    %878 = vmatprep.subr.mxu0 0.0
    %879 = vmatpush1.xpose.msra.mxu0 0.0
    %880 = vmatprep.subr.mxu0 0.0
    %881 = vmatpush1.xpose.msra.mxu0 0.0
    %882 = vmatprep.subr.mxu0 0.0
    %883 = vmatpush1.xpose.msra.mxu0 0.0
    %884 = vmatprep.subr.mxu0 0.0
    %885 = vmatpush1.xpose.msra.mxu0 0.0
    %886 = vmatprep.subr.mxu0 0.0
    %887 = vmatpush1.xpose.msra.mxu0 0.0
    %888 = vmatprep.subr.mxu0 0.0
    %889 = vmatpush1.xpose.msra.mxu0 0.0
    %890 = vmatprep.mubr.f32.mxu0 0.0
    %891 = vmatmul.mubr.f32.gmra.mrb[0].mxu0 %v821
    %v892 = vpop.f32.mrb[0].mxu0
    %v893 = vadd.f32 0.0, %v892
    %v894 = vpop.f32.mrb[0].mxu0
    %895 = vdwg.mxu0
    %v896 = vmul.f32 %v893, 0.25
    %vm897 = vcmp.gt.f32.partialorder %v819, 0.5
    %v898 = vsel %vm897, -1e+30, %v896
    %v899 = vsel %vm414, %v898, -inf
    %900 = vmax.xlane.f32.xlu0 %v899
    %v901 = vpop.xlane.xlu0 %900
    %v902 = vsub.f32 %v898, %v901
    %v903 = vmul.f32 %v902, 1.442695
    %v904 = vpow.pop %v903
    %v905 = vsel %vm414, %v904, 0.0
    %906 = vadd.xlane.f32.xlu0 %v905
    %v907 = vpop.xlane.xlu0 %906
    %v908 = vrcp.pop %v907
    %v909 = vmul.f32 %v904, %v908
    %v911 = vsel %vm414, %v909, 0
    %913 = vmatprep.subr.mxu0 0.0
    %914 = vmatpush1.msra.mxu0 %v330
    %915 = vmatprep.subr.mxu0 0.0
    %916 = vmatpush1.msra.mxu0 0.0
    %917 = vmatprep.subr.mxu0 0.0
    %918 = vmatpush1.msra.mxu0 0.0
    %919 = vmatprep.subr.mxu0 0.0
    %920 = vmatpush1.msra.mxu0 0.0
    %921 = vmatprep.subr.mxu0 0.0
    %922 = vmatpush1.msra.mxu0 0.0
    %923 = vmatprep.subr.mxu0 0.0
    %924 = vmatpush1.msra.mxu0 0.0
    %925 = vmatprep.subr.mxu0 0.0
    %926 = vmatpush1.msra.mxu0 0.0
    %927 = vmatprep.subr.mxu0 0.0
    %928 = vmatpush1.msra.mxu0 0.0
    %929 = vmatprep.subr.mxu0 0.0
    %930 = vmatpush1.msra.mxu0 0.0
    %931 = vmatprep.subr.mxu0 0.0
    %932 = vmatpush1.msra.mxu0 0.0
    %933 = vmatprep.subr.mxu0 0.0
    %934 = vmatpush1.msra.mxu0 0.0
    %935 = vmatprep.subr.mxu0 0.0
    %936 = vmatpush1.msra.mxu0 0.0
    %937 = vmatprep.subr.mxu0 0.0
    %938 = vmatpush1.msra.mxu0 0.0
    %939 = vmatprep.subr.mxu0 0.0
    %940 = vmatpush1.msra.mxu0 0.0
    %941 = vmatprep.subr.mxu0 0.0
    %942 = vmatpush1.msra.mxu0 0.0
    %943 = vmatprep.subr.mxu0 0.0
    %944 = vmatpush1.msra.mxu0 0.0
    %945 = vmatprep.subr.mxu0 0.0
    %946 = vmatpush1.msra.mxu0 0.0
    %947 = vmatprep.subr.mxu0 0.0
    %948 = vmatpush1.msra.mxu0 0.0
    %949 = vmatprep.subr.mxu0 0.0
    %950 = vmatpush1.msra.mxu0 0.0
    %951 = vmatprep.subr.mxu0 0.0
    %952 = vmatpush1.msra.mxu0 0.0
    %953 = vmatprep.subr.mxu0 0.0
    %954 = vmatpush1.msra.mxu0 0.0
    %955 = vmatprep.subr.mxu0 0.0
    %956 = vmatpush1.msra.mxu0 0.0
    %957 = vmatprep.subr.mxu0 0.0
    %958 = vmatpush1.msra.mxu0 0.0
    %959 = vmatprep.subr.mxu0 0.0
    %960 = vmatpush1.msra.mxu0 0.0
    %961 = vmatprep.subr.mxu0 0.0
    %962 = vmatpush1.msra.mxu0 0.0
    %963 = vmatprep.subr.mxu0 0.0
    %964 = vmatpush1.msra.mxu0 0.0
    %965 = vmatprep.subr.mxu0 0.0
    %966 = vmatpush1.msra.mxu0 0.0
    %967 = vmatprep.subr.mxu0 0.0
    %968 = vmatpush1.msra.mxu0 0.0
    %969 = vmatprep.subr.mxu0 0.0
    %970 = vmatpush1.msra.mxu0 0.0
    %971 = vmatprep.subr.mxu0 0.0
    %972 = vmatpush1.msra.mxu0 0.0
    %973 = vmatprep.subr.mxu0 0.0
    %974 = vmatpush1.msra.mxu0 0.0
    %975 = vmatprep.subr.mxu0 0.0
    %976 = vmatpush1.msra.mxu0 0.0
    %977 = vmatprep.mubr.f32.mxu0 0.0
    %978 = vmatmul.mubr.f32.gmra.mrb[0].mxu0 %v911
    %v979 = vpop.f32.mrb[0].mxu0
    %v980 = vadd.f32 0.0, %v979
    %v981 = vpop.f32.mrb[0].mxu0
    %982 = vdwg.mxu0
    %983 = vrot.lane.b32.xlu0 %v158, 112
    %v984 = vpop.permute.xlu0 %983
    %985 = vrot.lane.b32.xlu0 %v244, 112
    %v986 = vpop.permute.xlu0 %985
    %v987 = vsel %vm334, %v984, 0
    %v989 = vsel %vm334, %v986, 0
    %991 = vmatprep.subr.mxu0 0.0
    %992 = vmatpush1.xpose.msra.mxu0 %v989
    %993 = vmatprep.subr.mxu0 0.0
    %994 = vmatpush1.xpose.msra.mxu0 0.0
    %995 = vmatprep.subr.mxu0 0.0
    %996 = vmatpush1.xpose.msra.mxu0 0.0
    %997 = vmatprep.subr.mxu0 0.0
    %998 = vmatpush1.xpose.msra.mxu0 0.0
    %999 = vmatprep.subr.mxu0 0.0
    %1000 = vmatpush1.xpose.msra.mxu0 0.0
    %1001 = vmatprep.subr.mxu0 0.0
    %1002 = vmatpush1.xpose.msra.mxu0 0.0
    %1003 = vmatprep.subr.mxu0 0.0
    %1004 = vmatpush1.xpose.msra.mxu0 0.0
    %1005 = vmatprep.subr.mxu0 0.0
    %1006 = vmatpush1.xpose.msra.mxu0 0.0
    %1007 = vmatprep.subr.mxu0 0.0
    %1008 = vmatpush1.xpose.msra.mxu0 0.0
    %1009 = vmatprep.subr.mxu0 0.0
    %1010 = vmatpush1.xpose.msra.mxu0 0.0
    %1011 = vmatprep.subr.mxu0 0.0
    %1012 = vmatpush1.xpose.msra.mxu0 0.0
    %1013 = vmatprep.subr.mxu0 0.0
    %1014 = vmatpush1.xpose.msra.mxu0 0.0
    %1015 = vmatprep.subr.mxu0 0.0
    %1016 = vmatpush1.xpose.msra.mxu0 0.0
    %1017 = vmatprep.subr.mxu0 0.0
    %1018 = vmatpush1.xpose.msra.mxu0 0.0
    %1019 = vmatprep.subr.mxu0 0.0
    %1020 = vmatpush1.xpose.msra.mxu0 0.0
    %1021 = vmatprep.subr.mxu0 0.0
    %1022 = vmatpush1.xpose.msra.mxu0 0.0
    %1023 = vmatprep.subr.mxu0 0.0
    %1024 = vmatpush1.xpose.msra.mxu0 0.0
    %1025 = vmatprep.subr.mxu0 0.0
    %1026 = vmatpush1.xpose.msra.mxu0 0.0
    %1027 = vmatprep.subr.mxu0 0.0
    %1028 = vmatpush1.xpose.msra.mxu0 0.0
    %1029 = vmatprep.subr.mxu0 0.0
    %1030 = vmatpush1.xpose.msra.mxu0 0.0
    %1031 = vmatprep.subr.mxu0 0.0
    %1032 = vmatpush1.xpose.msra.mxu0 0.0
    %1033 = vmatprep.subr.mxu0 0.0
    %1034 = vmatpush1.xpose.msra.mxu0 0.0
    %1035 = vmatprep.subr.mxu0 0.0
    %1036 = vmatpush1.xpose.msra.mxu0 0.0
    %1037 = vmatprep.subr.mxu0 0.0
    %1038 = vmatpush1.xpose.msra.mxu0 0.0
    %1039 = vmatprep.subr.mxu0 0.0
    %1040 = vmatpush1.xpose.msra.mxu0 0.0
    %1041 = vmatprep.subr.mxu0 0.0
    %1042 = vmatpush1.xpose.msra.mxu0 0.0
    %1043 = vmatprep.subr.mxu0 0.0
    %1044 = vmatpush1.xpose.msra.mxu0 0.0
    %1045 = vmatprep.subr.mxu0 0.0
    %1046 = vmatpush1.xpose.msra.mxu0 0.0
    %1047 = vmatprep.subr.mxu0 0.0
    %1048 = vmatpush1.xpose.msra.mxu0 0.0
    %1049 = vmatprep.subr.mxu0 0.0
    %1050 = vmatpush1.xpose.msra.mxu0 0.0
    %1051 = vmatprep.subr.mxu0 0.0
    %1052 = vmatpush1.xpose.msra.mxu0 0.0
    %1053 = vmatprep.subr.mxu0 0.0
    %1054 = vmatpush1.xpose.msra.mxu0 0.0
    %1055 = vmatprep.mubr.f32.mxu0 0.0
    %1056 = vmatmul.mubr.f32.gmra.mrb[0].mxu0 %v987
    %v1057 = vpop.f32.mrb[0].mxu0
    %v1058 = vadd.f32 0.0, %v1057
    %v1059 = vpop.f32.mrb[0].mxu0
    %1060 = vdwg.mxu0
    %v1061 = vmul.f32 %v1058, 0.25
    %v1062 = vsel %vm897, -1e+30, %v1061
    %v1063 = vsel %vm414, %v1062, -inf
    %1064 = vmax.xlane.f32.xlu0 %v1063
    %v1065 = vpop.xlane.xlu0 %1064
    %v1066 = vsub.f32 %v1062, %v1065
    %v1067 = vmul.f32 %v1066, 1.442695
    %v1068 = vpow.pop %v1067
    %v1069 = vsel %vm414, %v1068, 0.0
    %1070 = vadd.xlane.f32.xlu0 %v1069
    %v1071 = vpop.xlane.xlu0 %1070
    %v1072 = vrcp.pop %v1071
    %v1073 = vmul.f32 %v1068, %v1072
    %1075 = vrot.lane.b32.xlu0 %v330, 112
    %v1076 = vpop.permute.xlu0 %1075
    %v1079 = vsel %vm414, %v1073, 0
    %1081 = vmatprep.subr.mxu0 0.0
    %1082 = vmatpush1.msra.mxu0 %v1076
    %1083 = vmatprep.subr.mxu0 0.0
    %1084 = vmatpush1.msra.mxu0 0.0
    %1085 = vmatprep.subr.mxu0 0.0
    %1086 = vmatpush1.msra.mxu0 0.0
    %1087 = vmatprep.subr.mxu0 0.0
    %1088 = vmatpush1.msra.mxu0 0.0
    %1089 = vmatprep.subr.mxu0 0.0
    %1090 = vmatpush1.msra.mxu0 0.0
    %1091 = vmatprep.subr.mxu0 0.0
    %1092 = vmatpush1.msra.mxu0 0.0
    %1093 = vmatprep.subr.mxu0 0.0
    %1094 = vmatpush1.msra.mxu0 0.0
    %1095 = vmatprep.subr.mxu0 0.0
    %1096 = vmatpush1.msra.mxu0 0.0
    %1097 = vmatprep.subr.mxu0 0.0
    %1098 = vmatpush1.msra.mxu0 0.0
    %1099 = vmatprep.subr.mxu0 0.0
    %1100 = vmatpush1.msra.mxu0 0.0
    %1101 = vmatprep.subr.mxu0 0.0
    %1102 = vmatpush1.msra.mxu0 0.0
    %1103 = vmatprep.subr.mxu0 0.0
    %1104 = vmatpush1.msra.mxu0 0.0
    %1105 = vmatprep.subr.mxu0 0.0
    %1106 = vmatpush1.msra.mxu0 0.0
    %1107 = vmatprep.subr.mxu0 0.0
    %1108 = vmatpush1.msra.mxu0 0.0
    %1109 = vmatprep.subr.mxu0 0.0
    %1110 = vmatpush1.msra.mxu0 0.0
    %1111 = vmatprep.subr.mxu0 0.0
    %1112 = vmatpush1.msra.mxu0 0.0
    %1113 = vmatprep.subr.mxu0 0.0
    %1114 = vmatpush1.msra.mxu0 0.0
    %1115 = vmatprep.subr.mxu0 0.0
    %1116 = vmatpush1.msra.mxu0 0.0
    %1117 = vmatprep.subr.mxu0 0.0
    %1118 = vmatpush1.msra.mxu0 0.0
    %1119 = vmatprep.subr.mxu0 0.0
    %1120 = vmatpush1.msra.mxu0 0.0
    %1121 = vmatprep.subr.mxu0 0.0
    %1122 = vmatpush1.msra.mxu0 0.0
    %1123 = vmatprep.subr.mxu0 0.0
    %1124 = vmatpush1.msra.mxu0 0.0
    %1125 = vmatprep.subr.mxu0 0.0
    %1126 = vmatpush1.msra.mxu0 0.0
    %1127 = vmatprep.subr.mxu0 0.0
    %1128 = vmatpush1.msra.mxu0 0.0
    %1129 = vmatprep.subr.mxu0 0.0
    %1130 = vmatpush1.msra.mxu0 0.0
    %1131 = vmatprep.subr.mxu0 0.0
    %1132 = vmatpush1.msra.mxu0 0.0
    %1133 = vmatprep.subr.mxu0 0.0
    %1134 = vmatpush1.msra.mxu0 0.0
    %1135 = vmatprep.subr.mxu0 0.0
    %1136 = vmatpush1.msra.mxu0 0.0
    %1137 = vmatprep.subr.mxu0 0.0
    %1138 = vmatpush1.msra.mxu0 0.0
    %1139 = vmatprep.subr.mxu0 0.0
    %1140 = vmatpush1.msra.mxu0 0.0
    %1141 = vmatprep.subr.mxu0 0.0
    %1142 = vmatpush1.msra.mxu0 0.0
    %1143 = vmatprep.subr.mxu0 0.0
    %1144 = vmatpush1.msra.mxu0 0.0
    %1145 = vmatprep.mubr.f32.mxu0 0.0
    %1146 = vmatmul.mubr.f32.gmra.mrb[0].mxu0 %v1079
    %v1147 = vpop.f32.mrb[0].mxu0
    %v1148 = vadd.f32 0.0, %v1147
    %v1149 = vpop.f32.mrb[0].mxu0
    %1150 = vdwg.mxu0
    %v1152 = vsel %vm334, %v1148, 0
    %1154 = vmatprep.subr.mxu0 0.0
    %1155 = vmatpush1.msra.mxu0 %v670
    %1156 = vmatprep.subr.mxu0 0.0
    %1157 = vmatpush1.msra.mxu0 %v671
    %1158 = vmatprep.subr.mxu0 0.0
    %1159 = vmatpush1.msra.mxu0 0.0
    %1160 = vmatprep.subr.mxu0 0.0
    %1161 = vmatpush1.msra.mxu0 0.0
    %1162 = vmatprep.subr.mxu0 0.0
    %1163 = vmatpush1.msra.mxu0 0.0
    %1164 = vmatprep.subr.mxu0 0.0
    %1165 = vmatpush1.msra.mxu0 0.0
    %1166 = vmatprep.subr.mxu0 0.0
    %1167 = vmatpush1.msra.mxu0 0.0
    %1168 = vmatprep.subr.mxu0 0.0
    %1169 = vmatpush1.msra.mxu0 0.0
    %1170 = vmatprep.subr.mxu0 0.0
    %1171 = vmatpush1.msra.mxu0 0.0
    %1172 = vmatprep.subr.mxu0 0.0
    %1173 = vmatpush1.msra.mxu0 0.0
    %1174 = vmatprep.subr.mxu0 0.0
    %1175 = vmatpush1.msra.mxu0 0.0
    %1176 = vmatprep.subr.mxu0 0.0
    %1177 = vmatpush1.msra.mxu0 0.0
    %1178 = vmatprep.subr.mxu0 0.0
    %1179 = vmatpush1.msra.mxu0 0.0
    %1180 = vmatprep.subr.mxu0 0.0
    %1181 = vmatpush1.msra.mxu0 0.0
    %1182 = vmatprep.subr.mxu0 0.0
    %1183 = vmatpush1.msra.mxu0 0.0
    %1184 = vmatprep.subr.mxu0 0.0
    %1185 = vmatpush1.msra.mxu0 0.0
    %1186 = vmatprep.subr.mxu0 0.0
    %1187 = vmatpush1.msra.mxu0 0.0
    %1188 = vmatprep.subr.mxu0 0.0
    %1189 = vmatpush1.msra.mxu0 0.0
    %1190 = vmatprep.subr.mxu0 0.0
    %1191 = vmatpush1.msra.mxu0 0.0
    %1192 = vmatprep.subr.mxu0 0.0
    %1193 = vmatpush1.msra.mxu0 0.0
    %1194 = vmatprep.subr.mxu0 0.0
    %1195 = vmatpush1.msra.mxu0 0.0
    %1196 = vmatprep.subr.mxu0 0.0
    %1197 = vmatpush1.msra.mxu0 0.0
    %1198 = vmatprep.subr.mxu0 0.0
    %1199 = vmatpush1.msra.mxu0 0.0
    %1200 = vmatprep.subr.mxu0 0.0
    %1201 = vmatpush1.msra.mxu0 0.0
    %1202 = vmatprep.subr.mxu0 0.0
    %1203 = vmatpush1.msra.mxu0 0.0
    %1204 = vmatprep.subr.mxu0 0.0
    %1205 = vmatpush1.msra.mxu0 0.0
    %1206 = vmatprep.subr.mxu0 0.0
    %1207 = vmatpush1.msra.mxu0 0.0
    %1208 = vmatprep.subr.mxu0 0.0
    %1209 = vmatpush1.msra.mxu0 0.0
    %1210 = vmatprep.subr.mxu0 0.0
    %1211 = vmatpush1.msra.mxu0 0.0
    %1212 = vmatprep.subr.mxu0 0.0
    %1213 = vmatpush1.msra.mxu0 0.0
    %1214 = vmatprep.subr.mxu0 0.0
    %1215 = vmatpush1.msra.mxu0 0.0
    %1216 = vmatprep.subr.mxu0 0.0
    %1217 = vmatpush1.msra.mxu0 0.0
    %1218 = vmatprep.mubr.f32.mxu0 0.0
    %1219 = vmatmul.mubr.f32.gmra.mrb[0].mxu0 %v1152
    %v1220 = vpop.f32.mrb[0].mxu0
    %v1221 = vadd.f32 0.0, %v1220
    %v1222 = vpop.f32.mrb[0].mxu0
    %1223 = vdwg.mxu0
    %v1225 = vsel %vm334, %v980, 0
    %1227 = vmatprep.subr.mxu0 0.0
    %1228 = vmatpush1.msra.mxu0 %v499
    %1229 = vmatprep.subr.mxu0 0.0
    %1230 = vmatpush1.msra.mxu0 %v500
    %1231 = vmatprep.subr.mxu0 0.0
    %1232 = vmatpush1.msra.mxu0 0.0
    %1233 = vmatprep.subr.mxu0 0.0
    %1234 = vmatpush1.msra.mxu0 0.0
    %1235 = vmatprep.subr.mxu0 0.0
    %1236 = vmatpush1.msra.mxu0 0.0
    %1237 = vmatprep.subr.mxu0 0.0
    %1238 = vmatpush1.msra.mxu0 0.0
    %1239 = vmatprep.subr.mxu0 0.0
    %1240 = vmatpush1.msra.mxu0 0.0
    %1241 = vmatprep.subr.mxu0 0.0
    %1242 = vmatpush1.msra.mxu0 0.0
    %1243 = vmatprep.subr.mxu0 0.0
    %1244 = vmatpush1.msra.mxu0 0.0
    %1245 = vmatprep.subr.mxu0 0.0
    %1246 = vmatpush1.msra.mxu0 0.0
    %1247 = vmatprep.subr.mxu0 0.0
    %1248 = vmatpush1.msra.mxu0 0.0
    %1249 = vmatprep.subr.mxu0 0.0
    %1250 = vmatpush1.msra.mxu0 0.0
    %1251 = vmatprep.subr.mxu0 0.0
    %1252 = vmatpush1.msra.mxu0 0.0
    %1253 = vmatprep.subr.mxu0 0.0
    %1254 = vmatpush1.msra.mxu0 0.0
    %1255 = vmatprep.subr.mxu0 0.0
    %1256 = vmatpush1.msra.mxu0 0.0
    %1257 = vmatprep.subr.mxu0 0.0
    %1258 = vmatpush1.msra.mxu0 0.0
    %1259 = vmatprep.subr.mxu0 0.0
    %1260 = vmatpush1.msra.mxu0 0.0
    %1261 = vmatprep.subr.mxu0 0.0
    %1262 = vmatpush1.msra.mxu0 0.0
    %1263 = vmatprep.subr.mxu0 0.0
    %1264 = vmatpush1.msra.mxu0 0.0
    %1265 = vmatprep.subr.mxu0 0.0
    %1266 = vmatpush1.msra.mxu0 0.0
    %1267 = vmatprep.subr.mxu0 0.0
    %1268 = vmatpush1.msra.mxu0 0.0
    %1269 = vmatprep.subr.mxu0 0.0
    %1270 = vmatpush1.msra.mxu0 0.0
    %1271 = vmatprep.subr.mxu0 0.0
    %1272 = vmatpush1.msra.mxu0 0.0
    %1273 = vmatprep.subr.mxu0 0.0
    %1274 = vmatpush1.msra.mxu0 0.0
    %1275 = vmatprep.subr.mxu0 0.0
    %1276 = vmatpush1.msra.mxu0 0.0
    %1277 = vmatprep.subr.mxu0 0.0
    %1278 = vmatpush1.msra.mxu0 0.0
    %1279 = vmatprep.subr.mxu0 0.0
    %1280 = vmatpush1.msra.mxu0 0.0
    %1281 = vmatprep.subr.mxu0 0.0
    %1282 = vmatpush1.msra.mxu0 0.0
    %1283 = vmatprep.subr.mxu0 0.0
    %1284 = vmatpush1.msra.mxu0 0.0
    %1285 = vmatprep.subr.mxu0 0.0
    %1286 = vmatpush1.msra.mxu0 0.0
    %1287 = vmatprep.subr.mxu0 0.0
    %1288 = vmatpush1.msra.mxu0 0.0
    %1289 = vmatprep.subr.mxu0 0.0
    %1290 = vmatpush1.msra.mxu0 0.0
    %1291 = vmatprep.mubr.f32.mxu0 0.0
    %1292 = vmatmul.mubr.f32.gmra.mrb[0].mxu0 %v1225
    %v1293 = vpop.f32.mrb[0].mxu0
    %v1294 = vadd.f32 %v1221, %v1293
    %v1295 = vpop.f32.mrb[0].mxu0
    %1296 = vdwg.mxu0
    %1297 = vst.msk [vmem:[#allocation4] sm:$0xff] %vm414, %v425
    %1298 = vst.msk [vmem:[#allocation4 + $0x8] sm:$0xff] %vm414, %v909
    %1299 = vst.msk [vmem:[#allocation4 + $0x10] sm:$0xff] %vm414, %v591
    %1300 = vst.msk [vmem:[#allocation4 + $0x18] sm:$0xff] %vm414, %v1073
    %v1301 = vld [vmem:[%s10] sm:$0x1]
    %v1303 = vlaneseq
    %v1304 = vshrl.u32 %v1303, 7
    %v1305 = vsub.s32 0, %v1304
    %v1306 = vrot.slane %v1301, %v1305
    %v1308 = vadd.f32 %v815, %v1306
    %v1309 = vadd.f32 %v1294, %v1306
    %v1310 = vadd.f32 %v1308, %v66
    %v1311 = vadd.f32 %v1309, %v67
    %v1312 = vsel %vm79, %v1310, 0.0
    %1313 = vadd.xlane.f32.xlu0 %v1312
    %v1314 = vpop.xlane.xlu0 %1313
    %v1315 = vsel %vm79, %v1311, 0.0
    %1316 = vadd.xlane.f32.xlu0 %v1315
    %v1317 = vpop.xlane.xlu0 %1316
    %v1318 = vrcp.pop 32.0
    %v1319 = vmul.f32 %v1314, %v1318
    %v1320 = vmul.f32 %v1317, %v1318
    %v1321 = vsub.f32 %v1310, %v1319
    %v1322 = vsub.f32 %v1311, %v1320
    %v1323 = vmul.f32 %v1321, %v1321
    %v1324 = vmul.f32 %v1322, %v1322
    %v1325 = vsel %vm79, %v1323, 0.0
    %1326 = vadd.xlane.f32.xlu0 %v1325
    %v1327 = vpop.xlane.xlu0 %1326
    %v1328 = vsel %vm79, %v1324, 0.0
    %1329 = vadd.xlane.f32.xlu0 %v1328
    %v1330 = vpop.xlane.xlu0 %1329
    %v1331 = vmul.f32 %v1327, %v1318
    %v1332 = vmul.f32 %v1330, %v1318
    %v1333 = vadd.f32 %v1331, 1e-05
    %v1334 = vadd.f32 %v1332, 1e-05
    %v1335 = vrsqrt.pop %v1333
    %v1336 = vrsqrt.pop %v1334
    %v1337 = vmul.f32 %v1321, %v1335
    %v1338 = vmul.f32 %v1322, %v1336
    %v1339 = vld [vmem:[%s11] sm:$0x1]
    %v1341 = vlaneseq
    %v1342 = vshrl.u32 %v1341, 7
    %v1343 = vsub.s32 0, %v1342
    %v1344 = vrot.slane %v1339, %v1343
    %v1346 = vmul.f32 %v1337, %v1344
    %v1347 = vmul.f32 %v1338, %v1344
    %v1348 = vld [vmem:[%s12] sm:$0x1]
    %v1350 = vlaneseq
    %v1351 = vshrl.u32 %v1350, 7
    %v1352 = vsub.s32 0, %v1351
    %v1353 = vrot.slane %v1348, %v1352
    %v1355 = vadd.f32 %v1346, %v1353
    %v1356 = vadd.f32 %v1347, %v1353
    %v1357 = vld [vmem:[%s2] sm:$0xff]
    %v1358 = vld [vmem:[%s2 + $0x8] sm:$0xff]
    %1360 = vset.pattern.permute.xlu0 0
    %1361 = vperm.xlu0 %1360, %v1357
    %v1362 = vpop.permute.xlu0 %1361
    %1365 = vset.pattern.permute.xlu0 0
    %1366 = vperm.xlu0 %1365, %v1358
    %v1367 = vpop.permute.xlu0 %1366
    %v1369 = vmul.f32 %v1355, %v1362
    %v1370 = vmul.f32 %v1356, %v1367
    %v1371 = vld [vmem:[%s13] sm:$0xff]
    %v1372 = vld [vmem:[%s13 + $0x8] sm:$0xff]
    %v1373 = vld [vmem:[%s13 + $0x10] sm:$0xff]
    %v1374 = vld [vmem:[%s13 + $0x18] sm:$0xff]
    %v1375 = vld [vmem:[%s14] sm:$0x1]
    %v1377 = vlaneseq
    %v1378 = vshrl.u32 %v1377, 7
    %v1379 = vsub.s32 0, %v1378
    %v1380 = vrot.slane %v1375, %v1379
    %v1383 = vsel %vm79, %v1369, 0
    %v1386 = vsel %vm79, %v1370, 0
    %1388 = vmatprep.subr.mxu0 0.0
    %1389 = vmatpush1.msra.mxu0 %v1371
    %1390 = vmatprep.subr.mxu0 0.0
    %1391 = vmatpush1.msra.mxu0 %v1372
    %1392 = vmatprep.subr.mxu0 0.0
    %1393 = vmatpush1.msra.mxu0 %v1373
    %1394 = vmatprep.subr.mxu0 0.0
    %1395 = vmatpush1.msra.mxu0 %v1374
    %1396 = vmatprep.subr.mxu0 0.0
    %1397 = vmatpush1.msra.mxu0 0.0
    %1398 = vmatprep.subr.mxu0 0.0
    %1399 = vmatpush1.msra.mxu0 0.0
    %1400 = vmatprep.subr.mxu0 0.0
    %1401 = vmatpush1.msra.mxu0 0.0
    %1402 = vmatprep.subr.mxu0 0.0
    %1403 = vmatpush1.msra.mxu0 0.0
    %1404 = vmatprep.subr.mxu0 0.0
    %1405 = vmatpush1.msra.mxu0 0.0
    %1406 = vmatprep.subr.mxu0 0.0
    %1407 = vmatpush1.msra.mxu0 0.0
    %1408 = vmatprep.subr.mxu0 0.0
    %1409 = vmatpush1.msra.mxu0 0.0
    %1410 = vmatprep.subr.mxu0 0.0
    %1411 = vmatpush1.msra.mxu0 0.0
    %1412 = vmatprep.subr.mxu0 0.0
    %1413 = vmatpush1.msra.mxu0 0.0
    %1414 = vmatprep.subr.mxu0 0.0
    %1415 = vmatpush1.msra.mxu0 0.0
    %1416 = vmatprep.subr.mxu0 0.0
    %1417 = vmatpush1.msra.mxu0 0.0
    %1418 = vmatprep.subr.mxu0 0.0
    %1419 = vmatpush1.msra.mxu0 0.0
    %1420 = vmatprep.subr.mxu0 0.0
    %1421 = vmatpush1.msra.mxu0 0.0
    %1422 = vmatprep.subr.mxu0 0.0
    %1423 = vmatpush1.msra.mxu0 0.0
    %1424 = vmatprep.subr.mxu0 0.0
    %1425 = vmatpush1.msra.mxu0 0.0
    %1426 = vmatprep.subr.mxu0 0.0
    %1427 = vmatpush1.msra.mxu0 0.0
    %1428 = vmatprep.subr.mxu0 0.0
    %1429 = vmatpush1.msra.mxu0 0.0
    %1430 = vmatprep.subr.mxu0 0.0
    %1431 = vmatpush1.msra.mxu0 0.0
    %1432 = vmatprep.subr.mxu0 0.0
    %1433 = vmatpush1.msra.mxu0 0.0
    %1434 = vmatprep.subr.mxu0 0.0
    %1435 = vmatpush1.msra.mxu0 0.0
    %1436 = vmatprep.subr.mxu0 0.0
    %1437 = vmatpush1.msra.mxu0 0.0
    %1438 = vmatprep.subr.mxu0 0.0
    %1439 = vmatpush1.msra.mxu0 0.0
    %1440 = vmatprep.subr.mxu0 0.0
    %1441 = vmatpush1.msra.mxu0 0.0
    %1442 = vmatprep.subr.mxu0 0.0
    %1443 = vmatpush1.msra.mxu0 0.0
    %1444 = vmatprep.subr.mxu0 0.0
    %1445 = vmatpush1.msra.mxu0 0.0
    %1446 = vmatprep.subr.mxu0 0.0
    %1447 = vmatpush1.msra.mxu0 0.0
    %1448 = vmatprep.subr.mxu0 0.0
    %1449 = vmatpush1.msra.mxu0 0.0
    %1450 = vmatprep.subr.mxu0 0.0
    %1451 = vmatpush1.msra.mxu0 0.0
    %1452 = vmatprep.mubr.f32.mxu0 0.0
    %1453 = vmatmul.mubr.f32.gmra.mrb[0].mxu0 %v1383
    %v1454 = vpop.f32.mrb[0].mxu0
    %v1455 = vadd.f32 %v1380, %v1454
    %v1456 = vpop.f32.mrb[0].mxu0
    %1457 = vmatprep.mubr.f32.mxu0 0.0
    %1458 = vmatmul.mubr.f32.gmra.mrb[0].mxu0 %v1386
    %v1459 = vpop.f32.mrb[0].mxu0
    %v1460 = vadd.f32 %v1380, %v1459
    %v1461 = vpop.f32.mrb[0].mxu0
    %1462 = vdwg.mxu0
    %v1463 = vmax.f32 %v1455, 0.0
    %v1464 = vmax.f32 %v1460, 0.0
    %v1465 = vld [vmem:[%s15] sm:$0xff]
    %v1466 = vld [vmem:[%s15 + $0x8] sm:$0xff]
    %v1467 = vld [vmem:[%s15 + $0x10] sm:$0xff]
    %v1468 = vld [vmem:[%s15 + $0x18] sm:$0xff]
    %v1469 = vld [vmem:[%s15 + $0x20] sm:$0xff]
    %v1470 = vld [vmem:[%s15 + $0x28] sm:$0xff]
    %v1471 = vld [vmem:[%s15 + $0x30] sm:$0xff]
    %v1472 = vld [vmem:[%s15 + $0x38] sm:$0xff]
    %v1473 = vld [vmem:[%s16] sm:$0x1]
    %v1475 = vlaneseq
    %v1476 = vshrl.u32 %v1475, 7
    %v1477 = vsub.s32 0, %v1476
    %v1478 = vrot.slane %v1473, %v1477
    %vm1480 = vcmask 523264
    %v1482 = vsel %vm1480, %v1463, 0
    %v1485 = vsel %vm1480, %v1464, 0
    %1487 = vmatprep.subr.mxu0 0.0
    %1488 = vmatpush1.msra.mxu0 %v1465
    %1489 = vmatprep.subr.mxu0 0.0
    %1490 = vmatpush1.msra.mxu0 %v1466
    %1491 = vmatprep.subr.mxu0 0.0
    %1492 = vmatpush1.msra.mxu0 %v1467
    %1493 = vmatprep.subr.mxu0 0.0
    %1494 = vmatpush1.msra.mxu0 %v1468
    %1495 = vmatprep.subr.mxu0 0.0
    %1496 = vmatpush1.msra.mxu0 %v1469
    %1497 = vmatprep.subr.mxu0 0.0
    %1498 = vmatpush1.msra.mxu0 %v1470
    %1499 = vmatprep.subr.mxu0 0.0
    %1500 = vmatpush1.msra.mxu0 %v1471
    %1501 = vmatprep.subr.mxu0 0.0
    %1502 = vmatpush1.msra.mxu0 %v1472
    %1503 = vmatprep.subr.mxu0 0.0
    %1504 = vmatpush1.msra.mxu0 0.0
    %1505 = vmatprep.subr.mxu0 0.0
    %1506 = vmatpush1.msra.mxu0 0.0
    %1507 = vmatprep.subr.mxu0 0.0
    %1508 = vmatpush1.msra.mxu0 0.0
    %1509 = vmatprep.subr.mxu0 0.0
    %1510 = vmatpush1.msra.mxu0 0.0
    %1511 = vmatprep.subr.mxu0 0.0
    %1512 = vmatpush1.msra.mxu0 0.0
    %1513 = vmatprep.subr.mxu0 0.0
    %1514 = vmatpush1.msra.mxu0 0.0
    %1515 = vmatprep.subr.mxu0 0.0
    %1516 = vmatpush1.msra.mxu0 0.0
    %1517 = vmatprep.subr.mxu0 0.0
    %1518 = vmatpush1.msra.mxu0 0.0
    %1519 = vmatprep.subr.mxu0 0.0
    %1520 = vmatpush1.msra.mxu0 0.0
    %1521 = vmatprep.subr.mxu0 0.0
    %1522 = vmatpush1.msra.mxu0 0.0
    %1523 = vmatprep.subr.mxu0 0.0
    %1524 = vmatpush1.msra.mxu0 0.0
    %1525 = vmatprep.subr.mxu0 0.0
    %1526 = vmatpush1.msra.mxu0 0.0
    %1527 = vmatprep.subr.mxu0 0.0
    %1528 = vmatpush1.msra.mxu0 0.0
    %1529 = vmatprep.subr.mxu0 0.0
    %1530 = vmatpush1.msra.mxu0 0.0
    %1531 = vmatprep.subr.mxu0 0.0
    %1532 = vmatpush1.msra.mxu0 0.0
    %1533 = vmatprep.subr.mxu0 0.0
    %1534 = vmatpush1.msra.mxu0 0.0
    %1535 = vmatprep.subr.mxu0 0.0
    %1536 = vmatpush1.msra.mxu0 0.0
    %1537 = vmatprep.subr.mxu0 0.0
    %1538 = vmatpush1.msra.mxu0 0.0
    %1539 = vmatprep.subr.mxu0 0.0
    %1540 = vmatpush1.msra.mxu0 0.0
    %1541 = vmatprep.subr.mxu0 0.0
    %1542 = vmatpush1.msra.mxu0 0.0
    %1543 = vmatprep.subr.mxu0 0.0
    %1544 = vmatpush1.msra.mxu0 0.0
    %1545 = vmatprep.subr.mxu0 0.0
    %1546 = vmatpush1.msra.mxu0 0.0
    %1547 = vmatprep.subr.mxu0 0.0
    %1548 = vmatpush1.msra.mxu0 0.0
    %1549 = vmatprep.subr.mxu0 0.0
    %1550 = vmatpush1.msra.mxu0 0.0
    %1551 = vmatprep.mubr.f32.mxu0 0.0
    %1552 = vmatmul.mubr.f32.gmra.mrb[0].mxu0 %v1482
    %v1553 = vpop.f32.mrb[0].mxu0
    %v1554 = vadd.f32 %v1478, %v1553
    %v1555 = vpop.f32.mrb[0].mxu0
    %1556 = vmatprep.mubr.f32.mxu0 0.0
    %1557 = vmatmul.mubr.f32.gmra.mrb[0].mxu0 %v1485
    %v1558 = vpop.f32.mrb[0].mxu0
    %v1559 = vadd.f32 %v1478, %v1558
    %v1560 = vpop.f32.mrb[0].mxu0
    %1561 = vdwg.mxu0
    %v1562 = vadd.f32 %v1554, %v1369
    %v1563 = vadd.f32 %v1559, %v1370
    %v1564 = vsel %vm79, %v1562, 0.0
    %1565 = vadd.xlane.f32.xlu0 %v1564
    %v1566 = vpop.xlane.xlu0 %1565
    %v1567 = vsel %vm79, %v1563, 0.0
    %1568 = vadd.xlane.f32.xlu0 %v1567
    %v1569 = vpop.xlane.xlu0 %1568
    %v1570 = vmul.f32 %v1566, %v1318
    %v1571 = vmul.f32 %v1569, %v1318
    %v1572 = vsub.f32 %v1562, %v1570
    %v1573 = vsub.f32 %v1563, %v1571
    %v1574 = vmul.f32 %v1572, %v1572
    %v1575 = vmul.f32 %v1573, %v1573
    %v1576 = vsel %vm79, %v1574, 0.0
    %1577 = vadd.xlane.f32.xlu0 %v1576
    %v1578 = vpop.xlane.xlu0 %1577
    %v1579 = vsel %vm79, %v1575, 0.0
    %1580 = vadd.xlane.f32.xlu0 %v1579
    %v1581 = vpop.xlane.xlu0 %1580
    %v1582 = vmul.f32 %v1578, %v1318
    %v1583 = vmul.f32 %v1581, %v1318
    %v1584 = vadd.f32 %v1582, 1e-05
    %v1585 = vadd.f32 %v1583, 1e-05
    %v1586 = vrsqrt.pop %v1584
    %v1587 = vrsqrt.pop %v1585
    %v1588 = vmul.f32 %v1572, %v1586
    %v1589 = vmul.f32 %v1573, %v1587
    %v1590 = vld [vmem:[%s17] sm:$0x1]
    %v1592 = vlaneseq
    %v1593 = vshrl.u32 %v1592, 7
    %v1594 = vsub.s32 0, %v1593
    %v1595 = vrot.slane %v1590, %v1594
    %v1597 = vmul.f32 %v1588, %v1595
    %v1598 = vmul.f32 %v1589, %v1595
    %v1599 = vld [vmem:[%s18] sm:$0x1]
    %v1601 = vlaneseq
    %v1602 = vshrl.u32 %v1601, 7
    %v1603 = vsub.s32 0, %v1602
    %v1604 = vrot.slane %v1599, %v1603
    %v1606 = vadd.f32 %v1597, %v1604
    %v1607 = vadd.f32 %v1598, %v1604
    %v1608 = vmul.f32 %v1606, %v1362
    %v1609 = vmul.f32 %v1607, %v1367
    %1610 = vst.msk [vmem:[#allocation2] sm:$0xff] %vm79, %v1608
    %1611 = vst.msk [vmem:[#allocation2 + $0x8] sm:$0xff] %vm79, %v1609
    // Predicated region
    $region78: #{encoder_layer.1} parent=1 // pred_check
      _
    $region79: #{encoder_layer.1} parent=1 // pred_check_branch
      %1613 = sbr.rel (0) target = $region81
    $region80: #{encoder_layer.1} parent=1 // pred_region
      %s1615 = ssub.s32 256, 256
      %1616 = vsyncadd [#allocation3], %s1615
      %s1617 = sshll.u32 [#allocation2], 4
      %s1618 = int_to_ptr.vmem [resolvable:$true] %s1617
      %1623 = dma.vmem_to_hbm [thread:$0]  %s1618, 256, %s19, [#allocation3], 128, 128, 8
    $region81: #{encoder_layer.1} parent=1 // pred_fallthru
      _
    // Predicated region
    $region82: #{encoder_layer.1} parent=1 // pred_check
      _
    $region83: #{encoder_layer.1} parent=1 // pred_check_branch
      %1625 = sbr.rel (0) target = $region85
    $region84: #{encoder_layer.1} parent=1 // pred_region
      %s1627 = ssub.s32 512, 512
      %1628 = vsyncadd [#allocation5], %s1627
      %s1629 = sshll.u32 [#allocation4], 4
      %s1630 = int_to_ptr.vmem [resolvable:$true] %s1629
      %1635 = dma.vmem_to_hbm [thread:$0]  %s1630, 512, %s20, [#allocation5], 128, 128, 8
    $region85: #{encoder_layer.1} parent=1 // pred_fallthru
      _
    // Predicated region
    $region86: #{encoder_layer.1} parent=1 // pred_check
      _
    $region87: #{encoder_layer.1} parent=1 // pred_check_branch
      %1637 = sbr.rel (0) target = $region89
    $region88: #{encoder_layer.1} parent=1 // pred_region
      %1638 = dma.done [#allocation3], 256
    $region89: #{encoder_layer.1} parent=1 // pred_fallthru
      _
    // Predicated region
    $region90: #{encoder_layer.1} parent=1 // pred_check
      _
    $region91: #{encoder_layer.1} parent=1 // pred_check_branch
      %1640 = sbr.rel (0) target = $region93
    $region92: #{encoder_layer.1} parent=1 // pred_region
      %1641 = dma.done [#allocation5], 512
    $region93: #{encoder_layer.1} parent=1 // pred_fallthru
      _
    %1642 = vsyncpa [#allocation3], 1
    %1643 = vsyncpa [#allocation5], 1

</llo_original>
